<compile_context>
chip_gen: v7x
topology: tpu7x:2x2x1
jax: 0.10.0
libtpu: 0.0.40
codegen_flags: <defaults>
</compile_context>

<pallas_src>
import jax
import jax.numpy as jnp
from jax.experimental import pallas as pl
from jax.experimental.pallas import tpu as pltpu

IN_FEATURES = 10
PACKED_LEN = IN_FEATURES + 1   # 10 fused weights + 1 fused bias
LANE = 128
MIN_TILE = 1024                # 8 sublanes * 128 lanes: keeps the lane-dense out block (8,128)-aligned


def _round_up(n, m):
    return ((n + m - 1) // m) * m


def _fused_gemv_kernel(x_ref, p_ref, o_ref):
    # x_ref: (tb, 10) native dtype | p_ref: (1, 11) f32 | o_ref: (tb//128, 128) f32
    x = x_ref[...].astype(jnp.float32)               # upcast in-kernel (no wrapper copy)
    w = p_ref[:, :IN_FEATURES]                       # (1, 10) broadcast over sublanes (VPU)
    b = p_ref[:, IN_FEATURES:]                       # (1, 1)
    r = jnp.sum(x * w, axis=-1, keepdims=True) + b   # (tb, 1): VPU mul + XLU lane reduce (MXU skipped)
    # Lane-dense store: (tb, 1) -> (tb//128, 128) so stores are unmasked, full-lane vst.
    o_ref[...] = r.reshape(o_ref.shape)


def fuse_params(params):
    """Collapse the three affine layers into one (1, 11) f32 slab. Call once per param set."""
    w1, b1, w2, b2, w3, b3 = params
    w_eff = w1 @ w2 @ w3                    # (10, 1)
    b_eff = (b1 @ w2 + b2) @ w3 + b3        # (1, 1)
    return jnp.concatenate([w_eff.T, b_eff], axis=1).astype(jnp.float32)  # (1, 11)


def dummy_model_forward_packed(x, packed, *, tile_b=8192):
    """Forward pass of the fused 3-layer MLP given the pre-fused (1, 11) parameter slab."""
    B, F = x.shape
    assert F == IN_FEATURES, F

    bp = _round_up(B, MIN_TILE)                                   # lane-dense output rows * 128
    tb = max(MIN_TILE, min(_round_up(tile_b, MIN_TILE), 16384, bp))
    grid = pl.cdiv(bp, tb)

    # Only a single-tile batch is ever padded (<= tb rows, negligible copy).  Multi-tile
    # batches rely on Pallas masking the ragged final block: no extra HBM pass over x,
    # and garbage tail rows land at flat positions >= B, sliced off below.
    if grid == 1 and B != tb:
        x = jnp.pad(x, ((0, tb - B), (0, 0)))

    itemsize = jnp.dtype(x.dtype).itemsize
    # VMEM budget against the *lane-padded* footprint: a (tb, 10) block occupies tb*128*itemsize,
    # the lane-dense (tb//128, 128) output block only tb*4 — both double-buffered.
    vmem_need = 2 * (tb * LANE * itemsize + tb * 4) + (1 << 20)
    cparams = dict(dimension_semantics=("parallel",))             # megacore sharding on v7x
    if vmem_need > (15 << 20):                                    # beyond v5e's default scoped limit
        cparams["vmem_limit_bytes"] = min(max(vmem_need, 32 << 20), 48 << 20)

    out2d = pl.pallas_call(
        _fused_gemv_kernel,
        out_shape=jax.ShapeDtypeStruct((bp // LANE, LANE), jnp.float32),
        grid=(grid,),
        in_specs=[
            pl.BlockSpec((tb, IN_FEATURES), lambda i: (i, 0)),    # stream batch tiles
            pl.BlockSpec((1, PACKED_LEN), lambda i: (0, 0)),      # params resident in VMEM
        ],
        out_specs=pl.BlockSpec((tb // LANE, LANE), lambda i: (i, 0)),  # lane-dense output
        compiler_params=pltpu.CompilerParams(**cparams),
        cost_estimate=pl.CostEstimate(
            flops=2 * B * IN_FEATURES + B,
            transcendentals=0,
            bytes_accessed=B * IN_FEATURES * itemsize + B * 4 + PACKED_LEN * 4,
        ),
    )(x, packed)

    # (bp//128, 128) row-major flattens back to batch order; slice off padded/garbage tail.
    return out2d.reshape(-1)[:B].reshape(B, 1)


def dummy_model_forward(x, params, *, tile_b=8192):
    """Convenience wrapper: fuses params then runs the kernel (prefer hoisting fuse_params)."""
    return dummy_model_forward_packed(x, fuse_params(params), tile_b=tile_b)


def init_params(key):
    """Deterministic init mimicking torch.nn.Linear defaults: U(-1/sqrt(fan_in), +1/sqrt(fan_in))."""
    dims = [(10, 10), (10, 4), (4, 1)]
    params = []
    for fan_in, fan_out in dims:
        key, kw, kb = jax.random.split(key, 3)
        bound = 1.0 / jnp.sqrt(jnp.float32(fan_in))
        # stored as [in, out] (already transposed vs. PyTorch's [out, in])
        w = jax.random.uniform(kw, (fan_in, fan_out), jnp.float32, -bound, bound)
        b = jax.random.uniform(kb, (1, fan_out), jnp.float32, -bound, bound)
        params.extend([w, b])
    return tuple(params)


def reference_forward(x, params):
    w1, b1, w2, b2, w3, b3 = params
    h = x @ w1 + b1
    h = h @ w2 + b2
    return h @ w3 + b3


if __name__ == "__main__":
    key = jax.random.PRNGKey(0)
    kx, kp = jax.random.split(key)
    params = init_params(kp)
    packed = fuse_params(params)                      # fusion hoisted: computed once per param set

    fwd = jax.jit(dummy_model_forward_packed, static_argnames=("tile_b",))

    # Small batch (the DummyModel test regime): single padded tile.
    batch = 8
    x = jax.random.normal(kx, (batch, IN_FEATURES), jnp.float32)
    out = jax.block_until_ready(fwd(x, packed))
    ref = reference_forward(x, params)
    assert out.shape == (batch, 1), out.shape
    # Layer fusion changes FP associativity; differences are ~1e-7, well within tolerance.
    assert jnp.allclose(out, ref, atol=1e-5, rtol=1e-5), (out, ref)

    # Multi-tile, non-divisible batch: exercises the cdiv grid + ragged final block (no jnp.pad).
    batch2 = 2500
    x2 = jax.random.normal(kx, (batch2, IN_FEATURES), jnp.float32)
    out2 = jax.block_until_ready(fwd(x2, packed, tile_b=1024))
    ref2 = reference_forward(x2, params)
    assert out2.shape == (batch2, 1), out2.shape
    assert jnp.allclose(out2, ref2, atol=1e-5, rtol=1e-5), "multi-tile mismatch"

    print("KERNEL_OK")
</pallas_src>

<mosaic_0001>
module attributes {stable_mosaic.version = 11 : i64} {
  func.func @_fused_gemv_kernel(%arg0: i32, %arg1: memref<1024x10xf32, #tpu.memory_space<vmem>>, %arg2: memref<1x11xf32, #tpu.memory_space<vmem>>, %arg3: memref<8x128xf32, #tpu.memory_space<vmem>>) attributes {dimension_semantics = [#tpu.dimension_semantics<parallel>], iteration_bounds = array<i64: 1>, scalar_prefetch = 0 : i64, scratch_operands = 0 : i64, tpu.core_type = #tpu.core_type<tc>, window_params = [{transform_indices = @transform_0, window_bounds = array<i64: 1024, 10>}, {pipeline_mode = #tpu.pipeline_mode<synchronous>, transform_indices = @transform_1, window_bounds = array<i64: 1, 11>}, {transform_indices = @transform_2, window_bounds = array<i64: 8, 128>}]} {
    %c0 = arith.constant 0 : index
    %c0_0 = arith.constant 0 : index
    %0 = vector.load %arg1[%c0, %c0_0] : memref<1024x10xf32, #tpu.memory_space<vmem>>, vector<1024x10xf32>
    %c0_1 = arith.constant 0 : index
    %c0_2 = arith.constant 0 : index
    %1 = vector.load %arg2[%c0_1, %c0_2] : memref<1x11xf32, #tpu.memory_space<vmem>>, vector<1x10xf32>
    %c0_3 = arith.constant 0 : index
    %c10 = arith.constant 10 : index
    %2 = vector.load %arg2[%c0_3, %c10] : memref<1x11xf32, #tpu.memory_space<vmem>>, vector<1x1xf32>
    %3 = vector.broadcast %1 : vector<1x10xf32> to vector<1024x10xf32>
    %4 = arith.mulf %0, %3 : vector<1024x10xf32>
    %cst = arith.constant dense<0.000000e+00> : vector<1024xf32>
    %5 = vector.multi_reduction <add>, %4, %cst [1] : vector<1024x10xf32> to vector<1024xf32>
    %6 = vector.shape_cast %5 : vector<1024xf32> to vector<1024x1xf32>
    %7 = vector.broadcast %2 : vector<1x1xf32> to vector<1024x1xf32>
    %8 = arith.addf %6, %7 : vector<1024x1xf32>
    %9 = vector.shape_cast %8 : vector<1024x1xf32> to vector<8x128xf32>
    %c0_4 = arith.constant 0 : index
    %c0_5 = arith.constant 0 : index
    %10 = vector.load %arg3[%c0_4, %c0_5] : memref<8x128xf32, #tpu.memory_space<vmem>>, vector<8x128xf32>
    tpu.vector_store %arg3[%c0_4, %c0_5], %9 {strides = array<i32>} : memref<8x128xf32, #tpu.memory_space<vmem>>, vector<8x128xf32>,
    return
  }
  func.func @transform_0(%arg0: i32) -> (i32, i32) {
    %c0_i32 = arith.constant 0 : i32
    %c0_i32_0 = arith.constant 0 : i32
    return %arg0, %c0_i32 : i32, i32
  }
  func.func @transform_1(%arg0: i32) -> (i32, i32) {
    %c0_i32 = arith.constant 0 : i32
    %c0_i32_0 = arith.constant 0 : i32
    %c0_i32_1 = arith.constant 0 : i32
    return %c0_i32, %c0_i32_0 : i32, i32
  }
  func.func @transform_2(%arg0: i32) -> (i32, i32) {
    %c0_i32 = arith.constant 0 : i32
    %c0_i32_0 = arith.constant 0 : i32
    return %arg0, %c0_i32 : i32, i32
  }
}

</mosaic_0001>

<llo_original>
// kernel: dummy_model_forward_packed.1
$region0: #{dummy_model_forward_packed.1}
  #allocation0 [shape = 'u32[]', space=smem, size = 0x4, offset = 0x4, fixed_abs, tag = 'smem constant byte address 0x4 - core index']
  #allocation1 [shape = 'u32[144,128]{1,0:T(1,128)}', space=vmem, size = 0x12000, scoped, tag = 'internal scratch']
  %s0 = inlined_call_operand.vmem [shape: f32[1024,10], index: 0, kind: input, shape index: {}]
  %s1 = inlined_call_operand.vmem [shape: f32[1,11], index: 1, kind: input, shape index: {}]
  %s2 = inlined_call_operand.vmem [shape: f32[8,128], index: 2, kind: output, shape index: {}]
  %s3 = sld [smem:[#allocation0]]
  $region18: #{dummy_model_forward_packed.1} parent=0
    _
  %s5 = ssub.s32 1, %s3
  %s6 = scalar_select 0, %s5, %s3
  // Predicated region
  $region2: #{dummy_model_forward_packed.1} parent=0 // pred_check
    _
  $region3: #{dummy_model_forward_packed.1} parent=0 // pred_check_branch
    %8 = sbr.rel (0) target = $region5
  $region4: #{dummy_model_forward_packed.1} parent=0 // pred_region
    _
  $region5: #{dummy_model_forward_packed.1} parent=0 // pred_fallthru
    _
  // Predicated region
  $region6: #{dummy_model_forward_packed.1} parent=0 // pred_check
    _
  $region7: #{dummy_model_forward_packed.1} parent=0 // pred_check_branch
    %10 = sbr.rel (0) target = $region9
  $region8: #{dummy_model_forward_packed.1} parent=0 // pred_region
    _
  $region9: #{dummy_model_forward_packed.1} parent=0 // pred_fallthru
    _
  %v11 = vld [vmem:[%s0] sm:$0xff]
  %v12 = vld [vmem:[%s0 + $0x8] sm:$0xff]
  %v13 = vld [vmem:[%s0 + $0x10] sm:$0xff]
  %v14 = vld [vmem:[%s0 + $0x18] sm:$0xff]
  %v15 = vld [vmem:[%s0 + $0x20] sm:$0xff]
  %v16 = vld [vmem:[%s0 + $0x28] sm:$0xff]
  %v17 = vld [vmem:[%s0 + $0x30] sm:$0xff]
  %v18 = vld [vmem:[%s0 + $0x38] sm:$0xff]
  %v19 = vld [vmem:[%s0 + $0x40] sm:$0xff]
  %v20 = vld [vmem:[%s0 + $0x48] sm:$0xff]
  %v21 = vld [vmem:[%s0 + $0x50] sm:$0xff]
  %v22 = vld [vmem:[%s0 + $0x58] sm:$0xff]
  %v23 = vld [vmem:[%s0 + $0x60] sm:$0xff]
  %v24 = vld [vmem:[%s0 + $0x68] sm:$0xff]
  %v25 = vld [vmem:[%s0 + $0x70] sm:$0xff]
  %v26 = vld [vmem:[%s0 + $0x78] sm:$0xff]
  %v27 = vld [vmem:[%s0 + $0x80] sm:$0xff]
  %v28 = vld [vmem:[%s0 + $0x88] sm:$0xff]
  %v29 = vld [vmem:[%s0 + $0x90] sm:$0xff]
  %v30 = vld [vmem:[%s0 + $0x98] sm:$0xff]
  %v31 = vld [vmem:[%s0 + $0xa0] sm:$0xff]
  %v32 = vld [vmem:[%s0 + $0xa8] sm:$0xff]
  %v33 = vld [vmem:[%s0 + $0xb0] sm:$0xff]
  %v34 = vld [vmem:[%s0 + $0xb8] sm:$0xff]
  %v35 = vld [vmem:[%s0 + $0xc0] sm:$0xff]
  %v36 = vld [vmem:[%s0 + $0xc8] sm:$0xff]
  %v37 = vld [vmem:[%s0 + $0xd0] sm:$0xff]
  %v38 = vld [vmem:[%s0 + $0xd8] sm:$0xff]
  %v39 = vld [vmem:[%s0 + $0xe0] sm:$0xff]
  %v40 = vld [vmem:[%s0 + $0xe8] sm:$0xff]
  %v41 = vld [vmem:[%s0 + $0xf0] sm:$0xff]
  %v42 = vld [vmem:[%s0 + $0xf8] sm:$0xff]
  %v43 = vld [vmem:[%s0 + $0x100] sm:$0xff]
  %v44 = vld [vmem:[%s0 + $0x108] sm:$0xff]
  %v45 = vld [vmem:[%s0 + $0x110] sm:$0xff]
  %v46 = vld [vmem:[%s0 + $0x118] sm:$0xff]
  %v47 = vld [vmem:[%s0 + $0x120] sm:$0xff]
  %v48 = vld [vmem:[%s0 + $0x128] sm:$0xff]
  %v49 = vld [vmem:[%s0 + $0x130] sm:$0xff]
  %v50 = vld [vmem:[%s0 + $0x138] sm:$0xff]
  %v51 = vld [vmem:[%s0 + $0x140] sm:$0xff]
  %v52 = vld [vmem:[%s0 + $0x148] sm:$0xff]
  %v53 = vld [vmem:[%s0 + $0x150] sm:$0xff]
  %v54 = vld [vmem:[%s0 + $0x158] sm:$0xff]
  %v55 = vld [vmem:[%s0 + $0x160] sm:$0xff]
  %v56 = vld [vmem:[%s0 + $0x168] sm:$0xff]
  %v57 = vld [vmem:[%s0 + $0x170] sm:$0xff]
  %v58 = vld [vmem:[%s0 + $0x178] sm:$0xff]
  %v59 = vld [vmem:[%s0 + $0x180] sm:$0xff]
  %v60 = vld [vmem:[%s0 + $0x188] sm:$0xff]
  %v61 = vld [vmem:[%s0 + $0x190] sm:$0xff]
  %v62 = vld [vmem:[%s0 + $0x198] sm:$0xff]
  %v63 = vld [vmem:[%s0 + $0x1a0] sm:$0xff]
  %v64 = vld [vmem:[%s0 + $0x1a8] sm:$0xff]
  %v65 = vld [vmem:[%s0 + $0x1b0] sm:$0xff]
  %v66 = vld [vmem:[%s0 + $0x1b8] sm:$0xff]
  %v67 = vld [vmem:[%s0 + $0x1c0] sm:$0xff]
  %v68 = vld [vmem:[%s0 + $0x1c8] sm:$0xff]
  %v69 = vld [vmem:[%s0 + $0x1d0] sm:$0xff]
  %v70 = vld [vmem:[%s0 + $0x1d8] sm:$0xff]
  %v71 = vld [vmem:[%s0 + $0x1e0] sm:$0xff]
  %v72 = vld [vmem:[%s0 + $0x1e8] sm:$0xff]
  %v73 = vld [vmem:[%s0 + $0x1f0] sm:$0xff]
  %v74 = vld [vmem:[%s0 + $0x1f8] sm:$0xff]
  %v75 = vld [vmem:[%s0 + $0x200] sm:$0xff]
  %v76 = vld [vmem:[%s0 + $0x208] sm:$0xff]
  %v77 = vld [vmem:[%s0 + $0x210] sm:$0xff]
  %v78 = vld [vmem:[%s0 + $0x218] sm:$0xff]
  %v79 = vld [vmem:[%s0 + $0x220] sm:$0xff]
  %v80 = vld [vmem:[%s0 + $0x228] sm:$0xff]
  %v81 = vld [vmem:[%s0 + $0x230] sm:$0xff]
  %v82 = vld [vmem:[%s0 + $0x238] sm:$0xff]
  %v83 = vld [vmem:[%s0 + $0x240] sm:$0xff]
  %v84 = vld [vmem:[%s0 + $0x248] sm:$0xff]
  %v85 = vld [vmem:[%s0 + $0x250] sm:$0xff]
  %v86 = vld [vmem:[%s0 + $0x258] sm:$0xff]
  %v87 = vld [vmem:[%s0 + $0x260] sm:$0xff]
  %v88 = vld [vmem:[%s0 + $0x268] sm:$0xff]
  %v89 = vld [vmem:[%s0 + $0x270] sm:$0xff]
  %v90 = vld [vmem:[%s0 + $0x278] sm:$0xff]
  %v91 = vld [vmem:[%s0 + $0x280] sm:$0xff]
  %v92 = vld [vmem:[%s0 + $0x288] sm:$0xff]
  %v93 = vld [vmem:[%s0 + $0x290] sm:$0xff]
  %v94 = vld [vmem:[%s0 + $0x298] sm:$0xff]
  %v95 = vld [vmem:[%s0 + $0x2a0] sm:$0xff]
  %v96 = vld [vmem:[%s0 + $0x2a8] sm:$0xff]
  %v97 = vld [vmem:[%s0 + $0x2b0] sm:$0xff]
  %v98 = vld [vmem:[%s0 + $0x2b8] sm:$0xff]
  %v99 = vld [vmem:[%s0 + $0x2c0] sm:$0xff]
  %v100 = vld [vmem:[%s0 + $0x2c8] sm:$0xff]
  %v101 = vld [vmem:[%s0 + $0x2d0] sm:$0xff]
  %v102 = vld [vmem:[%s0 + $0x2d8] sm:$0xff]
  %v103 = vld [vmem:[%s0 + $0x2e0] sm:$0xff]
  %v104 = vld [vmem:[%s0 + $0x2e8] sm:$0xff]
  %v105 = vld [vmem:[%s0 + $0x2f0] sm:$0xff]
  %v106 = vld [vmem:[%s0 + $0x2f8] sm:$0xff]
  %v107 = vld [vmem:[%s0 + $0x300] sm:$0xff]
  %v108 = vld [vmem:[%s0 + $0x308] sm:$0xff]
  %v109 = vld [vmem:[%s0 + $0x310] sm:$0xff]
  %v110 = vld [vmem:[%s0 + $0x318] sm:$0xff]
  %v111 = vld [vmem:[%s0 + $0x320] sm:$0xff]
  %v112 = vld [vmem:[%s0 + $0x328] sm:$0xff]
  %v113 = vld [vmem:[%s0 + $0x330] sm:$0xff]
  %v114 = vld [vmem:[%s0 + $0x338] sm:$0xff]
  %v115 = vld [vmem:[%s0 + $0x340] sm:$0xff]
  %v116 = vld [vmem:[%s0 + $0x348] sm:$0xff]
  %v117 = vld [vmem:[%s0 + $0x350] sm:$0xff]
  %v118 = vld [vmem:[%s0 + $0x358] sm:$0xff]
  %v119 = vld [vmem:[%s0 + $0x360] sm:$0xff]
  %v120 = vld [vmem:[%s0 + $0x368] sm:$0xff]
  %v121 = vld [vmem:[%s0 + $0x370] sm:$0xff]
  %v122 = vld [vmem:[%s0 + $0x378] sm:$0xff]
  %v123 = vld [vmem:[%s0 + $0x380] sm:$0xff]
  %v124 = vld [vmem:[%s0 + $0x388] sm:$0xff]
  %v125 = vld [vmem:[%s0 + $0x390] sm:$0xff]
  %v126 = vld [vmem:[%s0 + $0x398] sm:$0xff]
  %v127 = vld [vmem:[%s0 + $0x3a0] sm:$0xff]
  %v128 = vld [vmem:[%s0 + $0x3a8] sm:$0xff]
  %v129 = vld [vmem:[%s0 + $0x3b0] sm:$0xff]
  %v130 = vld [vmem:[%s0 + $0x3b8] sm:$0xff]
  %v131 = vld [vmem:[%s0 + $0x3c0] sm:$0xff]
  %v132 = vld [vmem:[%s0 + $0x3c8] sm:$0xff]
  %v133 = vld [vmem:[%s0 + $0x3d0] sm:$0xff]
  %v134 = vld [vmem:[%s0 + $0x3d8] sm:$0xff]
  %v135 = vld [vmem:[%s0 + $0x3e0] sm:$0xff]
  %v136 = vld [vmem:[%s0 + $0x3e8] sm:$0xff]
  %v137 = vld [vmem:[%s0 + $0x3f0] sm:$0xff]
  %v138 = vld [vmem:[%s0 + $0x3f8] sm:$0xff]
  %v139 = vld [vmem:[%s1] sm:$0x1]
  %v141 = vlaneseq
  %v142 = vshrl.u32 %v141, 7
  %v143 = vsub.s32 0, %v142
  %v144 = vrot.slane %v139, %v143
  %v146 = vmul.f32 %v11, %v144
  %v147 = vmul.f32 %v12, %v144
  %v148 = vmul.f32 %v13, %v144
  %v149 = vmul.f32 %v14, %v144
  %v150 = vmul.f32 %v15, %v144
  %v151 = vmul.f32 %v16, %v144
  %v152 = vmul.f32 %v17, %v144
  %v153 = vmul.f32 %v18, %v144
  %v154 = vmul.f32 %v19, %v144
  %v155 = vmul.f32 %v20, %v144
  %v156 = vmul.f32 %v21, %v144
  %v157 = vmul.f32 %v22, %v144
  %v158 = vmul.f32 %v23, %v144
  %v159 = vmul.f32 %v24, %v144
  %v160 = vmul.f32 %v25, %v144
  %v161 = vmul.f32 %v26, %v144
  %v162 = vmul.f32 %v27, %v144
  %v163 = vmul.f32 %v28, %v144
  %v164 = vmul.f32 %v29, %v144
  %v165 = vmul.f32 %v30, %v144
  %v166 = vmul.f32 %v31, %v144
  %v167 = vmul.f32 %v32, %v144
  %v168 = vmul.f32 %v33, %v144
  %v169 = vmul.f32 %v34, %v144
  %v170 = vmul.f32 %v35, %v144
  %v171 = vmul.f32 %v36, %v144
  %v172 = vmul.f32 %v37, %v144
  %v173 = vmul.f32 %v38, %v144
  %v174 = vmul.f32 %v39, %v144
  %v175 = vmul.f32 %v40, %v144
  %v176 = vmul.f32 %v41, %v144
  %v177 = vmul.f32 %v42, %v144
  %v178 = vmul.f32 %v43, %v144
  %v179 = vmul.f32 %v44, %v144
  %v180 = vmul.f32 %v45, %v144
  %v181 = vmul.f32 %v46, %v144
  %v182 = vmul.f32 %v47, %v144
  %v183 = vmul.f32 %v48, %v144
  %v184 = vmul.f32 %v49, %v144
  %v185 = vmul.f32 %v50, %v144
  %v186 = vmul.f32 %v51, %v144
  %v187 = vmul.f32 %v52, %v144
  %v188 = vmul.f32 %v53, %v144
  %v189 = vmul.f32 %v54, %v144
  %v190 = vmul.f32 %v55, %v144
  %v191 = vmul.f32 %v56, %v144
  %v192 = vmul.f32 %v57, %v144
  %v193 = vmul.f32 %v58, %v144
  %v194 = vmul.f32 %v59, %v144
  %v195 = vmul.f32 %v60, %v144
  %v196 = vmul.f32 %v61, %v144
  %v197 = vmul.f32 %v62, %v144
  %v198 = vmul.f32 %v63, %v144
  %v199 = vmul.f32 %v64, %v144
  %v200 = vmul.f32 %v65, %v144
  %v201 = vmul.f32 %v66, %v144
  %v202 = vmul.f32 %v67, %v144
  %v203 = vmul.f32 %v68, %v144
  %v204 = vmul.f32 %v69, %v144
  %v205 = vmul.f32 %v70, %v144
  %v206 = vmul.f32 %v71, %v144
  %v207 = vmul.f32 %v72, %v144
  %v208 = vmul.f32 %v73, %v144
  %v209 = vmul.f32 %v74, %v144
  %v210 = vmul.f32 %v75, %v144
  %v211 = vmul.f32 %v76, %v144
  %v212 = vmul.f32 %v77, %v144
  %v213 = vmul.f32 %v78, %v144
  %v214 = vmul.f32 %v79, %v144
  %v215 = vmul.f32 %v80, %v144
  %v216 = vmul.f32 %v81, %v144
  %v217 = vmul.f32 %v82, %v144
  %v218 = vmul.f32 %v83, %v144
  %v219 = vmul.f32 %v84, %v144
  %v220 = vmul.f32 %v85, %v144
  %v221 = vmul.f32 %v86, %v144
  %v222 = vmul.f32 %v87, %v144
  %v223 = vmul.f32 %v88, %v144
  %v224 = vmul.f32 %v89, %v144
  %v225 = vmul.f32 %v90, %v144
  %v226 = vmul.f32 %v91, %v144
  %v227 = vmul.f32 %v92, %v144
  %v228 = vmul.f32 %v93, %v144
  %v229 = vmul.f32 %v94, %v144
  %v230 = vmul.f32 %v95, %v144
  %v231 = vmul.f32 %v96, %v144
  %v232 = vmul.f32 %v97, %v144
  %v233 = vmul.f32 %v98, %v144
  %v234 = vmul.f32 %v99, %v144
  %v235 = vmul.f32 %v100, %v144
  %v236 = vmul.f32 %v101, %v144
  %v237 = vmul.f32 %v102, %v144
  %v238 = vmul.f32 %v103, %v144
  %v239 = vmul.f32 %v104, %v144
  %v240 = vmul.f32 %v105, %v144
  %v241 = vmul.f32 %v106, %v144
  %v242 = vmul.f32 %v107, %v144
  %v243 = vmul.f32 %v108, %v144
  %v244 = vmul.f32 %v109, %v144
  %v245 = vmul.f32 %v110, %v144
  %v246 = vmul.f32 %v111, %v144
  %v247 = vmul.f32 %v112, %v144
  %v248 = vmul.f32 %v113, %v144
  %v249 = vmul.f32 %v114, %v144
  %v250 = vmul.f32 %v115, %v144
  %v251 = vmul.f32 %v116, %v144
  %v252 = vmul.f32 %v117, %v144
  %v253 = vmul.f32 %v118, %v144
  %v254 = vmul.f32 %v119, %v144
  %v255 = vmul.f32 %v120, %v144
  %v256 = vmul.f32 %v121, %v144
  %v257 = vmul.f32 %v122, %v144
  %v258 = vmul.f32 %v123, %v144
  %v259 = vmul.f32 %v124, %v144
  %v260 = vmul.f32 %v125, %v144
  %v261 = vmul.f32 %v126, %v144
  %v262 = vmul.f32 %v127, %v144
  %v263 = vmul.f32 %v128, %v144
  %v264 = vmul.f32 %v129, %v144
  %v265 = vmul.f32 %v130, %v144
  %v266 = vmul.f32 %v131, %v144
  %v267 = vmul.f32 %v132, %v144
  %v268 = vmul.f32 %v133, %v144
  %v269 = vmul.f32 %v134, %v144
  %v270 = vmul.f32 %v135, %v144
  %v271 = vmul.f32 %v136, %v144
  %v272 = vmul.f32 %v137, %v144
  %v273 = vmul.f32 %v138, %v144
  %vm274 = vcmask 80896
  %v275 = vsel %vm274, %v146, 0.0
  %276 = vadd.xlane.f32.xlu0 %v275
  %v277 = vpop.xlane.xlu0 %276
  %v278 = vsel %vm274, %v147, 0.0
  %279 = vadd.xlane.f32.xlu0 %v278
  %v280 = vpop.xlane.xlu0 %279
  %v281 = vsel %vm274, %v148, 0.0
  %282 = vadd.xlane.f32.xlu0 %v281
  %v283 = vpop.xlane.xlu0 %282
  %v284 = vsel %vm274, %v149, 0.0
  %285 = vadd.xlane.f32.xlu0 %v284
  %v286 = vpop.xlane.xlu0 %285
  %v287 = vsel %vm274, %v150, 0.0
  %288 = vadd.xlane.f32.xlu0 %v287
  %v289 = vpop.xlane.xlu0 %288
  %v290 = vsel %vm274, %v151, 0.0
  %291 = vadd.xlane.f32.xlu0 %v290
  %v292 = vpop.xlane.xlu0 %291
  %v293 = vsel %vm274, %v152, 0.0
  %294 = vadd.xlane.f32.xlu0 %v293
  %v295 = vpop.xlane.xlu0 %294
  %v296 = vsel %vm274, %v153, 0.0
  %297 = vadd.xlane.f32.xlu0 %v296
  %v298 = vpop.xlane.xlu0 %297
  %v299 = vsel %vm274, %v154, 0.0
  %300 = vadd.xlane.f32.xlu0 %v299
  %v301 = vpop.xlane.xlu0 %300
  %v302 = vsel %vm274, %v155, 0.0
  %303 = vadd.xlane.f32.xlu0 %v302
  %v304 = vpop.xlane.xlu0 %303
  %v305 = vsel %vm274, %v156, 0.0
  %306 = vadd.xlane.f32.xlu0 %v305
  %v307 = vpop.xlane.xlu0 %306
  %v308 = vsel %vm274, %v157, 0.0
  %309 = vadd.xlane.f32.xlu0 %v308
  %v310 = vpop.xlane.xlu0 %309
  %v311 = vsel %vm274, %v158, 0.0
  %312 = vadd.xlane.f32.xlu0 %v311
  %v313 = vpop.xlane.xlu0 %312
  %v314 = vsel %vm274, %v159, 0.0
  %315 = vadd.xlane.f32.xlu0 %v314
  %v316 = vpop.xlane.xlu0 %315
  %v317 = vsel %vm274, %v160, 0.0
  %318 = vadd.xlane.f32.xlu0 %v317
  %v319 = vpop.xlane.xlu0 %318
  %v320 = vsel %vm274, %v161, 0.0
  %321 = vadd.xlane.f32.xlu0 %v320
  %v322 = vpop.xlane.xlu0 %321
  %v323 = vsel %vm274, %v162, 0.0
  %324 = vadd.xlane.f32.xlu0 %v323
  %v325 = vpop.xlane.xlu0 %324
  %v326 = vsel %vm274, %v163, 0.0
  %327 = vadd.xlane.f32.xlu0 %v326
  %v328 = vpop.xlane.xlu0 %327
  %v329 = vsel %vm274, %v164, 0.0
  %330 = vadd.xlane.f32.xlu0 %v329
  %v331 = vpop.xlane.xlu0 %330
  %v332 = vsel %vm274, %v165, 0.0
  %333 = vadd.xlane.f32.xlu0 %v332
  %v334 = vpop.xlane.xlu0 %333
  %v335 = vsel %vm274, %v166, 0.0
  %336 = vadd.xlane.f32.xlu0 %v335
  %v337 = vpop.xlane.xlu0 %336
  %v338 = vsel %vm274, %v167, 0.0
  %339 = vadd.xlane.f32.xlu0 %v338
  %v340 = vpop.xlane.xlu0 %339
  %v341 = vsel %vm274, %v168, 0.0
  %342 = vadd.xlane.f32.xlu0 %v341
  %v343 = vpop.xlane.xlu0 %342
  %v344 = vsel %vm274, %v169, 0.0
  %345 = vadd.xlane.f32.xlu0 %v344
  %v346 = vpop.xlane.xlu0 %345
  %v347 = vsel %vm274, %v170, 0.0
  %348 = vadd.xlane.f32.xlu0 %v347
  %v349 = vpop.xlane.xlu0 %348
  %v350 = vsel %vm274, %v171, 0.0
  %351 = vadd.xlane.f32.xlu0 %v350
  %v352 = vpop.xlane.xlu0 %351
  %v353 = vsel %vm274, %v172, 0.0
  %354 = vadd.xlane.f32.xlu0 %v353
  %v355 = vpop.xlane.xlu0 %354
  %v356 = vsel %vm274, %v173, 0.0
  %357 = vadd.xlane.f32.xlu0 %v356
  %v358 = vpop.xlane.xlu0 %357
  %v359 = vsel %vm274, %v174, 0.0
  %360 = vadd.xlane.f32.xlu0 %v359
  %v361 = vpop.xlane.xlu0 %360
  %v362 = vsel %vm274, %v175, 0.0
  %363 = vadd.xlane.f32.xlu0 %v362
  %v364 = vpop.xlane.xlu0 %363
  %v365 = vsel %vm274, %v176, 0.0
  %366 = vadd.xlane.f32.xlu0 %v365
  %v367 = vpop.xlane.xlu0 %366
  %v368 = vsel %vm274, %v177, 0.0
  %369 = vadd.xlane.f32.xlu0 %v368
  %v370 = vpop.xlane.xlu0 %369
  %v371 = vsel %vm274, %v178, 0.0
  %372 = vadd.xlane.f32.xlu0 %v371
  %v373 = vpop.xlane.xlu0 %372
  %v374 = vsel %vm274, %v179, 0.0
  %375 = vadd.xlane.f32.xlu0 %v374
  %v376 = vpop.xlane.xlu0 %375
  %v377 = vsel %vm274, %v180, 0.0
  %378 = vadd.xlane.f32.xlu0 %v377
  %v379 = vpop.xlane.xlu0 %378
  %v380 = vsel %vm274, %v181, 0.0
  %381 = vadd.xlane.f32.xlu0 %v380
  %v382 = vpop.xlane.xlu0 %381
  %v383 = vsel %vm274, %v182, 0.0
  %384 = vadd.xlane.f32.xlu0 %v383
  %v385 = vpop.xlane.xlu0 %384
  %v386 = vsel %vm274, %v183, 0.0
  %387 = vadd.xlane.f32.xlu0 %v386
  %v388 = vpop.xlane.xlu0 %387
  %v389 = vsel %vm274, %v184, 0.0
  %390 = vadd.xlane.f32.xlu0 %v389
  %v391 = vpop.xlane.xlu0 %390
  %v392 = vsel %vm274, %v185, 0.0
  %393 = vadd.xlane.f32.xlu0 %v392
  %v394 = vpop.xlane.xlu0 %393
  %v395 = vsel %vm274, %v186, 0.0
  %396 = vadd.xlane.f32.xlu0 %v395
  %v397 = vpop.xlane.xlu0 %396
  %v398 = vsel %vm274, %v187, 0.0
  %399 = vadd.xlane.f32.xlu0 %v398
  %v400 = vpop.xlane.xlu0 %399
  %v401 = vsel %vm274, %v188, 0.0
  %402 = vadd.xlane.f32.xlu0 %v401
  %v403 = vpop.xlane.xlu0 %402
  %v404 = vsel %vm274, %v189, 0.0
  %405 = vadd.xlane.f32.xlu0 %v404
  %v406 = vpop.xlane.xlu0 %405
  %v407 = vsel %vm274, %v190, 0.0
  %408 = vadd.xlane.f32.xlu0 %v407
  %v409 = vpop.xlane.xlu0 %408
  %v410 = vsel %vm274, %v191, 0.0
  %411 = vadd.xlane.f32.xlu0 %v410
  %v412 = vpop.xlane.xlu0 %411
  %v413 = vsel %vm274, %v192, 0.0
  %414 = vadd.xlane.f32.xlu0 %v413
  %v415 = vpop.xlane.xlu0 %414
  %v416 = vsel %vm274, %v193, 0.0
  %417 = vadd.xlane.f32.xlu0 %v416
  %v418 = vpop.xlane.xlu0 %417
  %v419 = vsel %vm274, %v194, 0.0
  %420 = vadd.xlane.f32.xlu0 %v419
  %v421 = vpop.xlane.xlu0 %420
  %v422 = vsel %vm274, %v195, 0.0
  %423 = vadd.xlane.f32.xlu0 %v422
  %v424 = vpop.xlane.xlu0 %423
  %v425 = vsel %vm274, %v196, 0.0
  %426 = vadd.xlane.f32.xlu0 %v425
  %v427 = vpop.xlane.xlu0 %426
  %v428 = vsel %vm274, %v197, 0.0
  %429 = vadd.xlane.f32.xlu0 %v428
  %v430 = vpop.xlane.xlu0 %429
  %v431 = vsel %vm274, %v198, 0.0
  %432 = vadd.xlane.f32.xlu0 %v431
  %v433 = vpop.xlane.xlu0 %432
  %v434 = vsel %vm274, %v199, 0.0
  %435 = vadd.xlane.f32.xlu0 %v434
  %v436 = vpop.xlane.xlu0 %435
  %v437 = vsel %vm274, %v200, 0.0
  %438 = vadd.xlane.f32.xlu0 %v437
  %v439 = vpop.xlane.xlu0 %438
  %v440 = vsel %vm274, %v201, 0.0
  %441 = vadd.xlane.f32.xlu0 %v440
  %v442 = vpop.xlane.xlu0 %441
  %v443 = vsel %vm274, %v202, 0.0
  %444 = vadd.xlane.f32.xlu0 %v443
  %v445 = vpop.xlane.xlu0 %444
  %v446 = vsel %vm274, %v203, 0.0
  %447 = vadd.xlane.f32.xlu0 %v446
  %v448 = vpop.xlane.xlu0 %447
  %v449 = vsel %vm274, %v204, 0.0
  %450 = vadd.xlane.f32.xlu0 %v449
  %v451 = vpop.xlane.xlu0 %450
  %v452 = vsel %vm274, %v205, 0.0
  %453 = vadd.xlane.f32.xlu0 %v452
  %v454 = vpop.xlane.xlu0 %453
  %v455 = vsel %vm274, %v206, 0.0
  %456 = vadd.xlane.f32.xlu0 %v455
  %v457 = vpop.xlane.xlu0 %456
  %v458 = vsel %vm274, %v207, 0.0
  %459 = vadd.xlane.f32.xlu0 %v458
  %v460 = vpop.xlane.xlu0 %459
  %v461 = vsel %vm274, %v208, 0.0
  %462 = vadd.xlane.f32.xlu0 %v461
  %v463 = vpop.xlane.xlu0 %462
  %v464 = vsel %vm274, %v209, 0.0
  %465 = vadd.xlane.f32.xlu0 %v464
  %v466 = vpop.xlane.xlu0 %465
  %v467 = vsel %vm274, %v210, 0.0
  %468 = vadd.xlane.f32.xlu0 %v467
  %v469 = vpop.xlane.xlu0 %468
  %v470 = vsel %vm274, %v211, 0.0
  %471 = vadd.xlane.f32.xlu0 %v470
  %v472 = vpop.xlane.xlu0 %471
  %v473 = vsel %vm274, %v212, 0.0
  %474 = vadd.xlane.f32.xlu0 %v473
  %v475 = vpop.xlane.xlu0 %474
  %v476 = vsel %vm274, %v213, 0.0
  %477 = vadd.xlane.f32.xlu0 %v476
  %v478 = vpop.xlane.xlu0 %477
  %v479 = vsel %vm274, %v214, 0.0
  %480 = vadd.xlane.f32.xlu0 %v479
  %v481 = vpop.xlane.xlu0 %480
  %v482 = vsel %vm274, %v215, 0.0
  %483 = vadd.xlane.f32.xlu0 %v482
  %v484 = vpop.xlane.xlu0 %483
  %v485 = vsel %vm274, %v216, 0.0
  %486 = vadd.xlane.f32.xlu0 %v485
  %v487 = vpop.xlane.xlu0 %486
  %v488 = vsel %vm274, %v217, 0.0
  %489 = vadd.xlane.f32.xlu0 %v488
  %v490 = vpop.xlane.xlu0 %489
  %v491 = vsel %vm274, %v218, 0.0
  %492 = vadd.xlane.f32.xlu0 %v491
  %v493 = vpop.xlane.xlu0 %492
  %v494 = vsel %vm274, %v219, 0.0
  %495 = vadd.xlane.f32.xlu0 %v494
  %v496 = vpop.xlane.xlu0 %495
  %v497 = vsel %vm274, %v220, 0.0
  %498 = vadd.xlane.f32.xlu0 %v497
  %v499 = vpop.xlane.xlu0 %498
  %v500 = vsel %vm274, %v221, 0.0
  %501 = vadd.xlane.f32.xlu0 %v500
  %v502 = vpop.xlane.xlu0 %501
  %v503 = vsel %vm274, %v222, 0.0
  %504 = vadd.xlane.f32.xlu0 %v503
  %v505 = vpop.xlane.xlu0 %504
  %v506 = vsel %vm274, %v223, 0.0
  %507 = vadd.xlane.f32.xlu0 %v506
  %v508 = vpop.xlane.xlu0 %507
  %v509 = vsel %vm274, %v224, 0.0
  %510 = vadd.xlane.f32.xlu0 %v509
  %v511 = vpop.xlane.xlu0 %510
  %v512 = vsel %vm274, %v225, 0.0
  %513 = vadd.xlane.f32.xlu0 %v512
  %v514 = vpop.xlane.xlu0 %513
  %v515 = vsel %vm274, %v226, 0.0
  %516 = vadd.xlane.f32.xlu0 %v515
  %v517 = vpop.xlane.xlu0 %516
  %v518 = vsel %vm274, %v227, 0.0
  %519 = vadd.xlane.f32.xlu0 %v518
  %v520 = vpop.xlane.xlu0 %519
  %v521 = vsel %vm274, %v228, 0.0
  %522 = vadd.xlane.f32.xlu0 %v521
  %v523 = vpop.xlane.xlu0 %522
  %v524 = vsel %vm274, %v229, 0.0
  %525 = vadd.xlane.f32.xlu0 %v524
  %v526 = vpop.xlane.xlu0 %525
  %v527 = vsel %vm274, %v230, 0.0
  %528 = vadd.xlane.f32.xlu0 %v527
  %v529 = vpop.xlane.xlu0 %528
  %v530 = vsel %vm274, %v231, 0.0
  %531 = vadd.xlane.f32.xlu0 %v530
  %v532 = vpop.xlane.xlu0 %531
  %v533 = vsel %vm274, %v232, 0.0
  %534 = vadd.xlane.f32.xlu0 %v533
  %v535 = vpop.xlane.xlu0 %534
  %v536 = vsel %vm274, %v233, 0.0
  %537 = vadd.xlane.f32.xlu0 %v536
  %v538 = vpop.xlane.xlu0 %537
  %v539 = vsel %vm274, %v234, 0.0
  %540 = vadd.xlane.f32.xlu0 %v539
  %v541 = vpop.xlane.xlu0 %540
  %v542 = vsel %vm274, %v235, 0.0
  %543 = vadd.xlane.f32.xlu0 %v542
  %v544 = vpop.xlane.xlu0 %543
  %v545 = vsel %vm274, %v236, 0.0
  %546 = vadd.xlane.f32.xlu0 %v545
  %v547 = vpop.xlane.xlu0 %546
  %v548 = vsel %vm274, %v237, 0.0
  %549 = vadd.xlane.f32.xlu0 %v548
  %v550 = vpop.xlane.xlu0 %549
  %v551 = vsel %vm274, %v238, 0.0
  %552 = vadd.xlane.f32.xlu0 %v551
  %v553 = vpop.xlane.xlu0 %552
  %v554 = vsel %vm274, %v239, 0.0
  %555 = vadd.xlane.f32.xlu0 %v554
  %v556 = vpop.xlane.xlu0 %555
  %v557 = vsel %vm274, %v240, 0.0
  %558 = vadd.xlane.f32.xlu0 %v557
  %v559 = vpop.xlane.xlu0 %558
  %v560 = vsel %vm274, %v241, 0.0
  %561 = vadd.xlane.f32.xlu0 %v560
  %v562 = vpop.xlane.xlu0 %561
  %v563 = vsel %vm274, %v242, 0.0
  %564 = vadd.xlane.f32.xlu0 %v563
  %v565 = vpop.xlane.xlu0 %564
  %v566 = vsel %vm274, %v243, 0.0
  %567 = vadd.xlane.f32.xlu0 %v566
  %v568 = vpop.xlane.xlu0 %567
  %v569 = vsel %vm274, %v244, 0.0
  %570 = vadd.xlane.f32.xlu0 %v569
  %v571 = vpop.xlane.xlu0 %570
  %v572 = vsel %vm274, %v245, 0.0
  %573 = vadd.xlane.f32.xlu0 %v572
  %v574 = vpop.xlane.xlu0 %573
  %v575 = vsel %vm274, %v246, 0.0
  %576 = vadd.xlane.f32.xlu0 %v575
  %v577 = vpop.xlane.xlu0 %576
  %v578 = vsel %vm274, %v247, 0.0
  %579 = vadd.xlane.f32.xlu0 %v578
  %v580 = vpop.xlane.xlu0 %579
  %v581 = vsel %vm274, %v248, 0.0
  %582 = vadd.xlane.f32.xlu0 %v581
  %v583 = vpop.xlane.xlu0 %582
  %v584 = vsel %vm274, %v249, 0.0
  %585 = vadd.xlane.f32.xlu0 %v584
  %v586 = vpop.xlane.xlu0 %585
  %v587 = vsel %vm274, %v250, 0.0
  %588 = vadd.xlane.f32.xlu0 %v587
  %v589 = vpop.xlane.xlu0 %588
  %v590 = vsel %vm274, %v251, 0.0
  %591 = vadd.xlane.f32.xlu0 %v590
  %v592 = vpop.xlane.xlu0 %591
  %v593 = vsel %vm274, %v252, 0.0
  %594 = vadd.xlane.f32.xlu0 %v593
  %v595 = vpop.xlane.xlu0 %594
  %v596 = vsel %vm274, %v253, 0.0
  %597 = vadd.xlane.f32.xlu0 %v596
  %v598 = vpop.xlane.xlu0 %597
  %v599 = vsel %vm274, %v254, 0.0
  %600 = vadd.xlane.f32.xlu0 %v599
  %v601 = vpop.xlane.xlu0 %600
  %v602 = vsel %vm274, %v255, 0.0
  %603 = vadd.xlane.f32.xlu0 %v602
  %v604 = vpop.xlane.xlu0 %603
  %v605 = vsel %vm274, %v256, 0.0
  %606 = vadd.xlane.f32.xlu0 %v605
  %v607 = vpop.xlane.xlu0 %606
  %v608 = vsel %vm274, %v257, 0.0
  %609 = vadd.xlane.f32.xlu0 %v608
  %v610 = vpop.xlane.xlu0 %609
  %v611 = vsel %vm274, %v258, 0.0
  %612 = vadd.xlane.f32.xlu0 %v611
  %v613 = vpop.xlane.xlu0 %612
  %v614 = vsel %vm274, %v259, 0.0
  %615 = vadd.xlane.f32.xlu0 %v614
  %v616 = vpop.xlane.xlu0 %615
  %v617 = vsel %vm274, %v260, 0.0
  %618 = vadd.xlane.f32.xlu0 %v617
  %v619 = vpop.xlane.xlu0 %618
  %v620 = vsel %vm274, %v261, 0.0
  %621 = vadd.xlane.f32.xlu0 %v620
  %v622 = vpop.xlane.xlu0 %621
  %v623 = vsel %vm274, %v262, 0.0
  %624 = vadd.xlane.f32.xlu0 %v623
  %v625 = vpop.xlane.xlu0 %624
  %v626 = vsel %vm274, %v263, 0.0
  %627 = vadd.xlane.f32.xlu0 %v626
  %v628 = vpop.xlane.xlu0 %627
  %v629 = vsel %vm274, %v264, 0.0
  %630 = vadd.xlane.f32.xlu0 %v629
  %v631 = vpop.xlane.xlu0 %630
  %v632 = vsel %vm274, %v265, 0.0
  %633 = vadd.xlane.f32.xlu0 %v632
  %v634 = vpop.xlane.xlu0 %633
  %v635 = vsel %vm274, %v266, 0.0
  %636 = vadd.xlane.f32.xlu0 %v635
  %v637 = vpop.xlane.xlu0 %636
  %v638 = vsel %vm274, %v267, 0.0
  %639 = vadd.xlane.f32.xlu0 %v638
  %v640 = vpop.xlane.xlu0 %639
  %v641 = vsel %vm274, %v268, 0.0
  %642 = vadd.xlane.f32.xlu0 %v641
  %v643 = vpop.xlane.xlu0 %642
  %v644 = vsel %vm274, %v269, 0.0
  %645 = vadd.xlane.f32.xlu0 %v644
  %v646 = vpop.xlane.xlu0 %645
  %v647 = vsel %vm274, %v270, 0.0
  %648 = vadd.xlane.f32.xlu0 %v647
  %v649 = vpop.xlane.xlu0 %648
  %v650 = vsel %vm274, %v271, 0.0
  %651 = vadd.xlane.f32.xlu0 %v650
  %v652 = vpop.xlane.xlu0 %651
  %v653 = vsel %vm274, %v272, 0.0
  %654 = vadd.xlane.f32.xlu0 %v653
  %v655 = vpop.xlane.xlu0 %654
  %v656 = vsel %vm274, %v273, 0.0
  %657 = vadd.xlane.f32.xlu0 %v656
  %v658 = vpop.xlane.xlu0 %657
  %v659 = vadd.f32 %v277, %v144
  %v660 = vadd.f32 %v280, %v144
  %v661 = vadd.f32 %v283, %v144
  %v662 = vadd.f32 %v286, %v144
  %v663 = vadd.f32 %v289, %v144
  %v664 = vadd.f32 %v292, %v144
  %v665 = vadd.f32 %v295, %v144
  %v666 = vadd.f32 %v298, %v144
  %v667 = vadd.f32 %v301, %v144
  %v668 = vadd.f32 %v304, %v144
  %v669 = vadd.f32 %v307, %v144
  %v670 = vadd.f32 %v310, %v144
  %v671 = vadd.f32 %v313, %v144
  %v672 = vadd.f32 %v316, %v144
  %v673 = vadd.f32 %v319, %v144
  %v674 = vadd.f32 %v322, %v144
  %v675 = vadd.f32 %v325, %v144
  %v676 = vadd.f32 %v328, %v144
  %v677 = vadd.f32 %v331, %v144
  %v678 = vadd.f32 %v334, %v144
  %v679 = vadd.f32 %v337, %v144
  %v680 = vadd.f32 %v340, %v144
  %v681 = vadd.f32 %v343, %v144
  %v682 = vadd.f32 %v346, %v144
  %v683 = vadd.f32 %v349, %v144
  %v684 = vadd.f32 %v352, %v144
  %v685 = vadd.f32 %v355, %v144
  %v686 = vadd.f32 %v358, %v144
  %v687 = vadd.f32 %v361, %v144
  %v688 = vadd.f32 %v364, %v144
  %v689 = vadd.f32 %v367, %v144
  %v690 = vadd.f32 %v370, %v144
  %v691 = vadd.f32 %v373, %v144
  %v692 = vadd.f32 %v376, %v144
  %v693 = vadd.f32 %v379, %v144
  %v694 = vadd.f32 %v382, %v144
  %v695 = vadd.f32 %v385, %v144
  %v696 = vadd.f32 %v388, %v144
  %v697 = vadd.f32 %v391, %v144
  %v698 = vadd.f32 %v394, %v144
  %v699 = vadd.f32 %v397, %v144
  %v700 = vadd.f32 %v400, %v144
  %v701 = vadd.f32 %v403, %v144
  %v702 = vadd.f32 %v406, %v144
  %v703 = vadd.f32 %v409, %v144
  %v704 = vadd.f32 %v412, %v144
  %v705 = vadd.f32 %v415, %v144
  %v706 = vadd.f32 %v418, %v144
  %v707 = vadd.f32 %v421, %v144
  %v708 = vadd.f32 %v424, %v144
  %v709 = vadd.f32 %v427, %v144
  %v710 = vadd.f32 %v430, %v144
  %v711 = vadd.f32 %v433, %v144
  %v712 = vadd.f32 %v436, %v144
  %v713 = vadd.f32 %v439, %v144
  %v714 = vadd.f32 %v442, %v144
  %v715 = vadd.f32 %v445, %v144
  %v716 = vadd.f32 %v448, %v144
  %v717 = vadd.f32 %v451, %v144
  %v718 = vadd.f32 %v454, %v144
  %v719 = vadd.f32 %v457, %v144
  %v720 = vadd.f32 %v460, %v144
  %v721 = vadd.f32 %v463, %v144
  %v722 = vadd.f32 %v466, %v144
  %v723 = vadd.f32 %v469, %v144
  %v724 = vadd.f32 %v472, %v144
  %v725 = vadd.f32 %v475, %v144
  %v726 = vadd.f32 %v478, %v144
  %v727 = vadd.f32 %v481, %v144
  %v728 = vadd.f32 %v484, %v144
  %v729 = vadd.f32 %v487, %v144
  %v730 = vadd.f32 %v490, %v144
  %v731 = vadd.f32 %v493, %v144
  %v732 = vadd.f32 %v496, %v144
  %v733 = vadd.f32 %v499, %v144
  %v734 = vadd.f32 %v502, %v144
  %v735 = vadd.f32 %v505, %v144
  %v736 = vadd.f32 %v508, %v144
  %v737 = vadd.f32 %v511, %v144
  %v738 = vadd.f32 %v514, %v144
  %v739 = vadd.f32 %v517, %v144
  %v740 = vadd.f32 %v520, %v144
  %v741 = vadd.f32 %v523, %v144
  %v742 = vadd.f32 %v526, %v144
  %v743 = vadd.f32 %v529, %v144
  %v744 = vadd.f32 %v532, %v144
  %v745 = vadd.f32 %v535, %v144
  %v746 = vadd.f32 %v538, %v144
  %v747 = vadd.f32 %v541, %v144
  %v748 = vadd.f32 %v544, %v144
  %v749 = vadd.f32 %v547, %v144
  %v750 = vadd.f32 %v550, %v144
  %v751 = vadd.f32 %v553, %v144
  %v752 = vadd.f32 %v556, %v144
  %v753 = vadd.f32 %v559, %v144
  %v754 = vadd.f32 %v562, %v144
  %v755 = vadd.f32 %v565, %v144
  %v756 = vadd.f32 %v568, %v144
  %v757 = vadd.f32 %v571, %v144
  %v758 = vadd.f32 %v574, %v144
  %v759 = vadd.f32 %v577, %v144
  %v760 = vadd.f32 %v580, %v144
  %v761 = vadd.f32 %v583, %v144
  %v762 = vadd.f32 %v586, %v144
  %v763 = vadd.f32 %v589, %v144
  %v764 = vadd.f32 %v592, %v144
  %v765 = vadd.f32 %v595, %v144
  %v766 = vadd.f32 %v598, %v144
  %v767 = vadd.f32 %v601, %v144
  %v768 = vadd.f32 %v604, %v144
  %v769 = vadd.f32 %v607, %v144
  %v770 = vadd.f32 %v610, %v144
  %v771 = vadd.f32 %v613, %v144
  %v772 = vadd.f32 %v616, %v144
  %v773 = vadd.f32 %v619, %v144
  %v774 = vadd.f32 %v622, %v144
  %v775 = vadd.f32 %v625, %v144
  %v776 = vadd.f32 %v628, %v144
  %v777 = vadd.f32 %v631, %v144
  %v778 = vadd.f32 %v634, %v144
  %v779 = vadd.f32 %v637, %v144
  %v780 = vadd.f32 %v640, %v144
  %v781 = vadd.f32 %v643, %v144
  %v782 = vadd.f32 %v646, %v144
  %v783 = vadd.f32 %v649, %v144
  %v784 = vadd.f32 %v652, %v144
  %v785 = vadd.f32 %v655, %v144
  %v786 = vadd.f32 %v658, %v144
  %915 = vset.pattern.permute.xlu0 10
  %916 = vperm.xlu0 %915, %v659
  %v917 = vpop.permute.xlu0 %916
  %918 = vset.pattern.permute.xlu0 10
  %919 = vperm.xlu0 %918, %v660
  %v920 = vpop.permute.xlu0 %919
  %921 = vset.pattern.permute.xlu0 10
  %922 = vperm.xlu0 %921, %v661
  %v923 = vpop.permute.xlu0 %922
  %924 = vset.pattern.permute.xlu0 10
  %925 = vperm.xlu0 %924, %v662
  %v926 = vpop.permute.xlu0 %925
  %927 = vset.pattern.permute.xlu0 10
  %928 = vperm.xlu0 %927, %v663
  %v929 = vpop.permute.xlu0 %928
  %930 = vset.pattern.permute.xlu0 10
  %931 = vperm.xlu0 %930, %v664
  %v932 = vpop.permute.xlu0 %931
  %933 = vset.pattern.permute.xlu0 10
  %934 = vperm.xlu0 %933, %v665
  %v935 = vpop.permute.xlu0 %934
  %936 = vset.pattern.permute.xlu0 10
  %937 = vperm.xlu0 %936, %v666
  %v938 = vpop.permute.xlu0 %937
  %939 = vset.pattern.permute.xlu0 10
  %940 = vperm.xlu0 %939, %v667
  %v941 = vpop.permute.xlu0 %940
  %942 = vset.pattern.permute.xlu0 10
  %943 = vperm.xlu0 %942, %v668
  %v944 = vpop.permute.xlu0 %943
  %945 = vset.pattern.permute.xlu0 10
  %946 = vperm.xlu0 %945, %v669
  %v947 = vpop.permute.xlu0 %946
  %948 = vset.pattern.permute.xlu0 10
  %949 = vperm.xlu0 %948, %v670
  %v950 = vpop.permute.xlu0 %949
  %951 = vset.pattern.permute.xlu0 10
  %952 = vperm.xlu0 %951, %v671
  %v953 = vpop.permute.xlu0 %952
  %954 = vset.pattern.permute.xlu0 10
  %955 = vperm.xlu0 %954, %v672
  %v956 = vpop.permute.xlu0 %955
  %957 = vset.pattern.permute.xlu0 10
  %958 = vperm.xlu0 %957, %v673
  %v959 = vpop.permute.xlu0 %958
  %960 = vset.pattern.permute.xlu0 10
  %961 = vperm.xlu0 %960, %v674
  %v962 = vpop.permute.xlu0 %961
  %963 = vset.pattern.permute.xlu0 10
  %964 = vperm.xlu0 %963, %v675
  %v965 = vpop.permute.xlu0 %964
  %966 = vset.pattern.permute.xlu0 10
  %967 = vperm.xlu0 %966, %v676
  %v968 = vpop.permute.xlu0 %967
  %969 = vset.pattern.permute.xlu0 10
  %970 = vperm.xlu0 %969, %v677
  %v971 = vpop.permute.xlu0 %970
  %972 = vset.pattern.permute.xlu0 10
  %973 = vperm.xlu0 %972, %v678
  %v974 = vpop.permute.xlu0 %973
  %975 = vset.pattern.permute.xlu0 10
  %976 = vperm.xlu0 %975, %v679
  %v977 = vpop.permute.xlu0 %976
  %978 = vset.pattern.permute.xlu0 10
  %979 = vperm.xlu0 %978, %v680
  %v980 = vpop.permute.xlu0 %979
  %981 = vset.pattern.permute.xlu0 10
  %982 = vperm.xlu0 %981, %v681
  %v983 = vpop.permute.xlu0 %982
  %984 = vset.pattern.permute.xlu0 10
  %985 = vperm.xlu0 %984, %v682
  %v986 = vpop.permute.xlu0 %985
  %987 = vset.pattern.permute.xlu0 10
  %988 = vperm.xlu0 %987, %v683
  %v989 = vpop.permute.xlu0 %988
  %990 = vset.pattern.permute.xlu0 10
  %991 = vperm.xlu0 %990, %v684
  %v992 = vpop.permute.xlu0 %991
  %993 = vset.pattern.permute.xlu0 10
  %994 = vperm.xlu0 %993, %v685
  %v995 = vpop.permute.xlu0 %994
  %996 = vset.pattern.permute.xlu0 10
  %997 = vperm.xlu0 %996, %v686
  %v998 = vpop.permute.xlu0 %997
  %999 = vset.pattern.permute.xlu0 10
  %1000 = vperm.xlu0 %999, %v687
  %v1001 = vpop.permute.xlu0 %1000
  %1002 = vset.pattern.permute.xlu0 10
  %1003 = vperm.xlu0 %1002, %v688
  %v1004 = vpop.permute.xlu0 %1003
  %1005 = vset.pattern.permute.xlu0 10
  %1006 = vperm.xlu0 %1005, %v689
  %v1007 = vpop.permute.xlu0 %1006
  %1008 = vset.pattern.permute.xlu0 10
  %1009 = vperm.xlu0 %1008, %v690
  %v1010 = vpop.permute.xlu0 %1009
  %1011 = vset.pattern.permute.xlu0 10
  %1012 = vperm.xlu0 %1011, %v691
  %v1013 = vpop.permute.xlu0 %1012
  %1014 = vset.pattern.permute.xlu0 10
  %1015 = vperm.xlu0 %1014, %v692
  %v1016 = vpop.permute.xlu0 %1015
  %1017 = vset.pattern.permute.xlu0 10
  %1018 = vperm.xlu0 %1017, %v693
  %v1019 = vpop.permute.xlu0 %1018
  %1020 = vset.pattern.permute.xlu0 10
  %1021 = vperm.xlu0 %1020, %v694
  %v1022 = vpop.permute.xlu0 %1021
  %1023 = vset.pattern.permute.xlu0 10
  %1024 = vperm.xlu0 %1023, %v695
  %v1025 = vpop.permute.xlu0 %1024
  %1026 = vset.pattern.permute.xlu0 10
  %1027 = vperm.xlu0 %1026, %v696
  %v1028 = vpop.permute.xlu0 %1027
  %1029 = vset.pattern.permute.xlu0 10
  %1030 = vperm.xlu0 %1029, %v697
  %v1031 = vpop.permute.xlu0 %1030
  %1032 = vset.pattern.permute.xlu0 10
  %1033 = vperm.xlu0 %1032, %v698
  %v1034 = vpop.permute.xlu0 %1033
  %1035 = vset.pattern.permute.xlu0 10
  %1036 = vperm.xlu0 %1035, %v699
  %v1037 = vpop.permute.xlu0 %1036
  %1038 = vset.pattern.permute.xlu0 10
  %1039 = vperm.xlu0 %1038, %v700
  %v1040 = vpop.permute.xlu0 %1039
  %1041 = vset.pattern.permute.xlu0 10
  %1042 = vperm.xlu0 %1041, %v701
  %v1043 = vpop.permute.xlu0 %1042
  %1044 = vset.pattern.permute.xlu0 10
  %1045 = vperm.xlu0 %1044, %v702
  %v1046 = vpop.permute.xlu0 %1045
  %1047 = vset.pattern.permute.xlu0 10
  %1048 = vperm.xlu0 %1047, %v703
  %v1049 = vpop.permute.xlu0 %1048
  %1050 = vset.pattern.permute.xlu0 10
  %1051 = vperm.xlu0 %1050, %v704
  %v1052 = vpop.permute.xlu0 %1051
  %1053 = vset.pattern.permute.xlu0 10
  %1054 = vperm.xlu0 %1053, %v705
  %v1055 = vpop.permute.xlu0 %1054
  %1056 = vset.pattern.permute.xlu0 10
  %1057 = vperm.xlu0 %1056, %v706
  %v1058 = vpop.permute.xlu0 %1057
  %1059 = vset.pattern.permute.xlu0 10
  %1060 = vperm.xlu0 %1059, %v707
  %v1061 = vpop.permute.xlu0 %1060
  %1062 = vset.pattern.permute.xlu0 10
  %1063 = vperm.xlu0 %1062, %v708
  %v1064 = vpop.permute.xlu0 %1063
  %1065 = vset.pattern.permute.xlu0 10
  %1066 = vperm.xlu0 %1065, %v709
  %v1067 = vpop.permute.xlu0 %1066
  %1068 = vset.pattern.permute.xlu0 10
  %1069 = vperm.xlu0 %1068, %v710
  %v1070 = vpop.permute.xlu0 %1069
  %1071 = vset.pattern.permute.xlu0 10
  %1072 = vperm.xlu0 %1071, %v711
  %v1073 = vpop.permute.xlu0 %1072
  %1074 = vset.pattern.permute.xlu0 10
  %1075 = vperm.xlu0 %1074, %v712
  %v1076 = vpop.permute.xlu0 %1075
  %1077 = vset.pattern.permute.xlu0 10
  %1078 = vperm.xlu0 %1077, %v713
  %v1079 = vpop.permute.xlu0 %1078
  %1080 = vset.pattern.permute.xlu0 10
  %1081 = vperm.xlu0 %1080, %v714
  %v1082 = vpop.permute.xlu0 %1081
  %1083 = vset.pattern.permute.xlu0 10
  %1084 = vperm.xlu0 %1083, %v715
  %v1085 = vpop.permute.xlu0 %1084
  %1086 = vset.pattern.permute.xlu0 10
  %1087 = vperm.xlu0 %1086, %v716
  %v1088 = vpop.permute.xlu0 %1087
  %1089 = vset.pattern.permute.xlu0 10
  %1090 = vperm.xlu0 %1089, %v717
  %v1091 = vpop.permute.xlu0 %1090
  %1092 = vset.pattern.permute.xlu0 10
  %1093 = vperm.xlu0 %1092, %v718
  %v1094 = vpop.permute.xlu0 %1093
  %1095 = vset.pattern.permute.xlu0 10
  %1096 = vperm.xlu0 %1095, %v719
  %v1097 = vpop.permute.xlu0 %1096
  %1098 = vset.pattern.permute.xlu0 10
  %1099 = vperm.xlu0 %1098, %v720
  %v1100 = vpop.permute.xlu0 %1099
  %1101 = vset.pattern.permute.xlu0 10
  %1102 = vperm.xlu0 %1101, %v721
  %v1103 = vpop.permute.xlu0 %1102
  %1104 = vset.pattern.permute.xlu0 10
  %1105 = vperm.xlu0 %1104, %v722
  %v1106 = vpop.permute.xlu0 %1105
  %1107 = vset.pattern.permute.xlu0 10
  %1108 = vperm.xlu0 %1107, %v723
  %v1109 = vpop.permute.xlu0 %1108
  %1110 = vset.pattern.permute.xlu0 10
  %1111 = vperm.xlu0 %1110, %v724
  %v1112 = vpop.permute.xlu0 %1111
  %1113 = vset.pattern.permute.xlu0 10
  %1114 = vperm.xlu0 %1113, %v725
  %v1115 = vpop.permute.xlu0 %1114
  %1116 = vset.pattern.permute.xlu0 10
  %1117 = vperm.xlu0 %1116, %v726
  %v1118 = vpop.permute.xlu0 %1117
  %1119 = vset.pattern.permute.xlu0 10
  %1120 = vperm.xlu0 %1119, %v727
  %v1121 = vpop.permute.xlu0 %1120
  %1122 = vset.pattern.permute.xlu0 10
  %1123 = vperm.xlu0 %1122, %v728
  %v1124 = vpop.permute.xlu0 %1123
  %1125 = vset.pattern.permute.xlu0 10
  %1126 = vperm.xlu0 %1125, %v729
  %v1127 = vpop.permute.xlu0 %1126
  %1128 = vset.pattern.permute.xlu0 10
  %1129 = vperm.xlu0 %1128, %v730
  %v1130 = vpop.permute.xlu0 %1129
  %1131 = vset.pattern.permute.xlu0 10
  %1132 = vperm.xlu0 %1131, %v731
  %v1133 = vpop.permute.xlu0 %1132
  %1134 = vset.pattern.permute.xlu0 10
  %1135 = vperm.xlu0 %1134, %v732
  %v1136 = vpop.permute.xlu0 %1135
  %1137 = vset.pattern.permute.xlu0 10
  %1138 = vperm.xlu0 %1137, %v733
  %v1139 = vpop.permute.xlu0 %1138
  %1140 = vset.pattern.permute.xlu0 10
  %1141 = vperm.xlu0 %1140, %v734
  %v1142 = vpop.permute.xlu0 %1141
  %1143 = vset.pattern.permute.xlu0 10
  %1144 = vperm.xlu0 %1143, %v735
  %v1145 = vpop.permute.xlu0 %1144
  %1146 = vset.pattern.permute.xlu0 10
  %1147 = vperm.xlu0 %1146, %v736
  %v1148 = vpop.permute.xlu0 %1147
  %1149 = vset.pattern.permute.xlu0 10
  %1150 = vperm.xlu0 %1149, %v737
  %v1151 = vpop.permute.xlu0 %1150
  %1152 = vset.pattern.permute.xlu0 10
  %1153 = vperm.xlu0 %1152, %v738
  %v1154 = vpop.permute.xlu0 %1153
  %1155 = vset.pattern.permute.xlu0 10
  %1156 = vperm.xlu0 %1155, %v739
  %v1157 = vpop.permute.xlu0 %1156
  %1158 = vset.pattern.permute.xlu0 10
  %1159 = vperm.xlu0 %1158, %v740
  %v1160 = vpop.permute.xlu0 %1159
  %1161 = vset.pattern.permute.xlu0 10
  %1162 = vperm.xlu0 %1161, %v741
  %v1163 = vpop.permute.xlu0 %1162
  %1164 = vset.pattern.permute.xlu0 10
  %1165 = vperm.xlu0 %1164, %v742
  %v1166 = vpop.permute.xlu0 %1165
  %1167 = vset.pattern.permute.xlu0 10
  %1168 = vperm.xlu0 %1167, %v743
  %v1169 = vpop.permute.xlu0 %1168
  %1170 = vset.pattern.permute.xlu0 10
  %1171 = vperm.xlu0 %1170, %v744
  %v1172 = vpop.permute.xlu0 %1171
  %1173 = vset.pattern.permute.xlu0 10
  %1174 = vperm.xlu0 %1173, %v745
  %v1175 = vpop.permute.xlu0 %1174
  %1176 = vset.pattern.permute.xlu0 10
  %1177 = vperm.xlu0 %1176, %v746
  %v1178 = vpop.permute.xlu0 %1177
  %1179 = vset.pattern.permute.xlu0 10
  %1180 = vperm.xlu0 %1179, %v747
  %v1181 = vpop.permute.xlu0 %1180
  %1182 = vset.pattern.permute.xlu0 10
  %1183 = vperm.xlu0 %1182, %v748
  %v1184 = vpop.permute.xlu0 %1183
  %1185 = vset.pattern.permute.xlu0 10
  %1186 = vperm.xlu0 %1185, %v749
  %v1187 = vpop.permute.xlu0 %1186
  %1188 = vset.pattern.permute.xlu0 10
  %1189 = vperm.xlu0 %1188, %v750
  %v1190 = vpop.permute.xlu0 %1189
  %1191 = vset.pattern.permute.xlu0 10
  %1192 = vperm.xlu0 %1191, %v751
  %v1193 = vpop.permute.xlu0 %1192
  %1194 = vset.pattern.permute.xlu0 10
  %1195 = vperm.xlu0 %1194, %v752
  %v1196 = vpop.permute.xlu0 %1195
  %1197 = vset.pattern.permute.xlu0 10
  %1198 = vperm.xlu0 %1197, %v753
  %v1199 = vpop.permute.xlu0 %1198
  %1200 = vset.pattern.permute.xlu0 10
  %1201 = vperm.xlu0 %1200, %v754
  %v1202 = vpop.permute.xlu0 %1201
  %1203 = vset.pattern.permute.xlu0 10
  %1204 = vperm.xlu0 %1203, %v755
  %v1205 = vpop.permute.xlu0 %1204
  %1206 = vset.pattern.permute.xlu0 10
  %1207 = vperm.xlu0 %1206, %v756
  %v1208 = vpop.permute.xlu0 %1207
  %1209 = vset.pattern.permute.xlu0 10
  %1210 = vperm.xlu0 %1209, %v757
  %v1211 = vpop.permute.xlu0 %1210
  %1212 = vset.pattern.permute.xlu0 10
  %1213 = vperm.xlu0 %1212, %v758
  %v1214 = vpop.permute.xlu0 %1213
  %1215 = vset.pattern.permute.xlu0 10
  %1216 = vperm.xlu0 %1215, %v759
  %v1217 = vpop.permute.xlu0 %1216
  %1218 = vset.pattern.permute.xlu0 10
  %1219 = vperm.xlu0 %1218, %v760
  %v1220 = vpop.permute.xlu0 %1219
  %1221 = vset.pattern.permute.xlu0 10
  %1222 = vperm.xlu0 %1221, %v761
  %v1223 = vpop.permute.xlu0 %1222
  %1224 = vset.pattern.permute.xlu0 10
  %1225 = vperm.xlu0 %1224, %v762
  %v1226 = vpop.permute.xlu0 %1225
  %1227 = vset.pattern.permute.xlu0 10
  %1228 = vperm.xlu0 %1227, %v763
  %v1229 = vpop.permute.xlu0 %1228
  %1230 = vset.pattern.permute.xlu0 10
  %1231 = vperm.xlu0 %1230, %v764
  %v1232 = vpop.permute.xlu0 %1231
  %1233 = vset.pattern.permute.xlu0 10
  %1234 = vperm.xlu0 %1233, %v765
  %v1235 = vpop.permute.xlu0 %1234
  %1236 = vset.pattern.permute.xlu0 10
  %1237 = vperm.xlu0 %1236, %v766
  %v1238 = vpop.permute.xlu0 %1237
  %1239 = vset.pattern.permute.xlu0 10
  %1240 = vperm.xlu0 %1239, %v767
  %v1241 = vpop.permute.xlu0 %1240
  %1242 = vset.pattern.permute.xlu0 10
  %1243 = vperm.xlu0 %1242, %v768
  %v1244 = vpop.permute.xlu0 %1243
  %1245 = vset.pattern.permute.xlu0 10
  %1246 = vperm.xlu0 %1245, %v769
  %v1247 = vpop.permute.xlu0 %1246
  %1248 = vset.pattern.permute.xlu0 10
  %1249 = vperm.xlu0 %1248, %v770
  %v1250 = vpop.permute.xlu0 %1249
  %1251 = vset.pattern.permute.xlu0 10
  %1252 = vperm.xlu0 %1251, %v771
  %v1253 = vpop.permute.xlu0 %1252
  %1254 = vset.pattern.permute.xlu0 10
  %1255 = vperm.xlu0 %1254, %v772
  %v1256 = vpop.permute.xlu0 %1255
  %1257 = vset.pattern.permute.xlu0 10
  %1258 = vperm.xlu0 %1257, %v773
  %v1259 = vpop.permute.xlu0 %1258
  %1260 = vset.pattern.permute.xlu0 10
  %1261 = vperm.xlu0 %1260, %v774
  %v1262 = vpop.permute.xlu0 %1261
  %1263 = vset.pattern.permute.xlu0 10
  %1264 = vperm.xlu0 %1263, %v775
  %v1265 = vpop.permute.xlu0 %1264
  %1266 = vset.pattern.permute.xlu0 10
  %1267 = vperm.xlu0 %1266, %v776
  %v1268 = vpop.permute.xlu0 %1267
  %1269 = vset.pattern.permute.xlu0 10
  %1270 = vperm.xlu0 %1269, %v777
  %v1271 = vpop.permute.xlu0 %1270
  %1272 = vset.pattern.permute.xlu0 10
  %1273 = vperm.xlu0 %1272, %v778
  %v1274 = vpop.permute.xlu0 %1273
  %1275 = vset.pattern.permute.xlu0 10
  %1276 = vperm.xlu0 %1275, %v779
  %v1277 = vpop.permute.xlu0 %1276
  %1278 = vset.pattern.permute.xlu0 10
  %1279 = vperm.xlu0 %1278, %v780
  %v1280 = vpop.permute.xlu0 %1279
  %1281 = vset.pattern.permute.xlu0 10
  %1282 = vperm.xlu0 %1281, %v781
  %v1283 = vpop.permute.xlu0 %1282
  %1284 = vset.pattern.permute.xlu0 10
  %1285 = vperm.xlu0 %1284, %v782
  %v1286 = vpop.permute.xlu0 %1285
  %1287 = vset.pattern.permute.xlu0 10
  %1288 = vperm.xlu0 %1287, %v783
  %v1289 = vpop.permute.xlu0 %1288
  %1290 = vset.pattern.permute.xlu0 10
  %1291 = vperm.xlu0 %1290, %v784
  %v1292 = vpop.permute.xlu0 %1291
  %1293 = vset.pattern.permute.xlu0 10
  %1294 = vperm.xlu0 %1293, %v785
  %v1295 = vpop.permute.xlu0 %1294
  %1296 = vset.pattern.permute.xlu0 10
  %1297 = vperm.xlu0 %1296, %v786
  %v1298 = vpop.permute.xlu0 %1297
  %v1299 = vlaneseq
  %v1300 = vand.u32 %v1299, 127
  %v1301 = vlaneseq
  %v1302 = vshrl.u32 %v1301, 7
  %v1303 = vsub.s32 %v1300, %v1302
  %v1304 = vrot.slane %v917, %v1303
  %v1305 = vadd.s32 %v1300, 4294967288
  %v1306 = vlaneseq
  %v1307 = vshrl.u32 %v1306, 7
  %v1308 = vsub.s32 %v1305, %v1307
  %v1309 = vrot.slane %v920, %v1308
  %vm1310 = vcmask 130112
  %v1311 = vsel %vm1310, %v1309, %v1304
  %v1312 = vadd.s32 %v1300, 4294967280
  %v1313 = vlaneseq
  %v1314 = vshrl.u32 %v1313, 7
  %v1315 = vsub.s32 %v1312, %v1314
  %v1316 = vrot.slane %v923, %v1315
  %vm1317 = vcmask 195712
  %v1318 = vsel %vm1317, %v1316, %v1311
  %v1319 = vadd.s32 %v1300, 4294967272
  %v1320 = vlaneseq
  %v1321 = vshrl.u32 %v1320, 7
  %v1322 = vsub.s32 %v1319, %v1321
  %v1323 = vrot.slane %v926, %v1322
  %vm1324 = vcmask 261312
  %v1325 = vsel %vm1324, %v1323, %v1318
  %v1326 = vadd.s32 %v1300, 4294967264
  %v1327 = vlaneseq
  %v1328 = vshrl.u32 %v1327, 7
  %v1329 = vsub.s32 %v1326, %v1328
  %v1330 = vrot.slane %v929, %v1329
  %vm1331 = vcmask 326912
  %v1332 = vsel %vm1331, %v1330, %v1325
  %v1333 = vadd.s32 %v1300, 4294967256
  %v1334 = vlaneseq
  %v1335 = vshrl.u32 %v1334, 7
  %v1336 = vsub.s32 %v1333, %v1335
  %v1337 = vrot.slane %v932, %v1336
  %vm1338 = vcmask 392512
  %v1339 = vsel %vm1338, %v1337, %v1332
  %v1340 = vadd.s32 %v1300, 4294967248
  %v1341 = vlaneseq
  %v1342 = vshrl.u32 %v1341, 7
  %v1343 = vsub.s32 %v1340, %v1342
  %v1344 = vrot.slane %v935, %v1343
  %vm1345 = vcmask 458112
  %v1346 = vsel %vm1345, %v1344, %v1339
  %v1347 = vadd.s32 %v1300, 4294967240
  %v1348 = vlaneseq
  %v1349 = vshrl.u32 %v1348, 7
  %v1350 = vsub.s32 %v1347, %v1349
  %v1351 = vrot.slane %v938, %v1350
  %vm1352 = vcmask 523712
  %v1353 = vsel %vm1352, %v1351, %v1346
  %v1354 = vadd.s32 %v1300, 4294967232
  %v1355 = vlaneseq
  %v1356 = vshrl.u32 %v1355, 7
  %v1357 = vsub.s32 %v1354, %v1356
  %v1358 = vrot.slane %v941, %v1357
  %vm1359 = vcmask 589312
  %v1360 = vsel %vm1359, %v1358, %v1353
  %v1361 = vadd.s32 %v1300, 4294967224
  %v1362 = vlaneseq
  %v1363 = vshrl.u32 %v1362, 7
  %v1364 = vsub.s32 %v1361, %v1363
  %v1365 = vrot.slane %v944, %v1364
  %vm1366 = vcmask 654912
  %v1367 = vsel %vm1366, %v1365, %v1360
  %v1368 = vadd.s32 %v1300, 4294967216
  %v1369 = vlaneseq
  %v1370 = vshrl.u32 %v1369, 7
  %v1371 = vsub.s32 %v1368, %v1370
  %v1372 = vrot.slane %v947, %v1371
  %vm1373 = vcmask 720512
  %v1374 = vsel %vm1373, %v1372, %v1367
  %v1375 = vadd.s32 %v1300, 4294967208
  %v1376 = vlaneseq
  %v1377 = vshrl.u32 %v1376, 7
  %v1378 = vsub.s32 %v1375, %v1377
  %v1379 = vrot.slane %v950, %v1378
  %vm1380 = vcmask 786112
  %v1381 = vsel %vm1380, %v1379, %v1374
  %v1382 = vadd.s32 %v1300, 4294967200
  %v1383 = vlaneseq
  %v1384 = vshrl.u32 %v1383, 7
  %v1385 = vsub.s32 %v1382, %v1384
  %v1386 = vrot.slane %v953, %v1385
  %vm1387 = vcmask 851712
  %v1388 = vsel %vm1387, %v1386, %v1381
  %v1389 = vadd.s32 %v1300, 4294967192
  %v1390 = vlaneseq
  %v1391 = vshrl.u32 %v1390, 7
  %v1392 = vsub.s32 %v1389, %v1391
  %v1393 = vrot.slane %v956, %v1392
  %vm1394 = vcmask 917312
  %v1395 = vsel %vm1394, %v1393, %v1388
  %v1396 = vadd.s32 %v1300, 4294967184
  %v1397 = vlaneseq
  %v1398 = vshrl.u32 %v1397, 7
  %v1399 = vsub.s32 %v1396, %v1398
  %v1400 = vrot.slane %v959, %v1399
  %vm1401 = vcmask 982912
  %v1402 = vsel %vm1401, %v1400, %v1395
  %v1403 = vadd.s32 %v1300, 4294967176
  %v1404 = vlaneseq
  %v1405 = vshrl.u32 %v1404, 7
  %v1406 = vsub.s32 %v1403, %v1405
  %v1407 = vrot.slane %v962, %v1406
  %vm1408 = vcmask 1048512
  %v1409 = vsel %vm1408, %v1407, %v1402
  %v1410 = vlaneseq
  %v1411 = vshrl.u32 %v1410, 7
  %v1412 = vsub.s32 %v1300, %v1411
  %v1413 = vrot.slane %v965, %v1412
  %v1414 = vlaneseq
  %v1415 = vshrl.u32 %v1414, 7
  %v1416 = vsub.s32 %v1305, %v1415
  %v1417 = vrot.slane %v968, %v1416
  %v1418 = vsel %vm1310, %v1417, %v1413
  %v1419 = vlaneseq
  %v1420 = vshrl.u32 %v1419, 7
  %v1421 = vsub.s32 %v1312, %v1420
  %v1422 = vrot.slane %v971, %v1421
  %v1423 = vsel %vm1317, %v1422, %v1418
  %v1424 = vlaneseq
  %v1425 = vshrl.u32 %v1424, 7
  %v1426 = vsub.s32 %v1319, %v1425
  %v1427 = vrot.slane %v974, %v1426
  %v1428 = vsel %vm1324, %v1427, %v1423
  %v1429 = vlaneseq
  %v1430 = vshrl.u32 %v1429, 7
  %v1431 = vsub.s32 %v1326, %v1430
  %v1432 = vrot.slane %v977, %v1431
  %v1433 = vsel %vm1331, %v1432, %v1428
  %v1434 = vlaneseq
  %v1435 = vshrl.u32 %v1434, 7
  %v1436 = vsub.s32 %v1333, %v1435
  %v1437 = vrot.slane %v980, %v1436
  %v1438 = vsel %vm1338, %v1437, %v1433
  %v1439 = vlaneseq
  %v1440 = vshrl.u32 %v1439, 7
  %v1441 = vsub.s32 %v1340, %v1440
  %v1442 = vrot.slane %v983, %v1441
  %v1443 = vsel %vm1345, %v1442, %v1438
  %v1444 = vlaneseq
  %v1445 = vshrl.u32 %v1444, 7
  %v1446 = vsub.s32 %v1347, %v1445
  %v1447 = vrot.slane %v986, %v1446
  %v1448 = vsel %vm1352, %v1447, %v1443
  %v1449 = vlaneseq
  %v1450 = vshrl.u32 %v1449, 7
  %v1451 = vsub.s32 %v1354, %v1450
  %v1452 = vrot.slane %v989, %v1451
  %v1453 = vsel %vm1359, %v1452, %v1448
  %v1454 = vlaneseq
  %v1455 = vshrl.u32 %v1454, 7
  %v1456 = vsub.s32 %v1361, %v1455
  %v1457 = vrot.slane %v992, %v1456
  %v1458 = vsel %vm1366, %v1457, %v1453
  %v1459 = vlaneseq
  %v1460 = vshrl.u32 %v1459, 7
  %v1461 = vsub.s32 %v1368, %v1460
  %v1462 = vrot.slane %v995, %v1461
  %v1463 = vsel %vm1373, %v1462, %v1458
  %v1464 = vlaneseq
  %v1465 = vshrl.u32 %v1464, 7
  %v1466 = vsub.s32 %v1375, %v1465
  %v1467 = vrot.slane %v998, %v1466
  %v1468 = vsel %vm1380, %v1467, %v1463
  %v1469 = vlaneseq
  %v1470 = vshrl.u32 %v1469, 7
  %v1471 = vsub.s32 %v1382, %v1470
  %v1472 = vrot.slane %v1001, %v1471
  %v1473 = vsel %vm1387, %v1472, %v1468
  %v1474 = vlaneseq
  %v1475 = vshrl.u32 %v1474, 7
  %v1476 = vsub.s32 %v1389, %v1475
  %v1477 = vrot.slane %v1004, %v1476
  %v1478 = vsel %vm1394, %v1477, %v1473
  %v1479 = vlaneseq
  %v1480 = vshrl.u32 %v1479, 7
  %v1481 = vsub.s32 %v1396, %v1480
  %v1482 = vrot.slane %v1007, %v1481
  %v1483 = vsel %vm1401, %v1482, %v1478
  %v1484 = vlaneseq
  %v1485 = vshrl.u32 %v1484, 7
  %v1486 = vsub.s32 %v1403, %v1485
  %v1487 = vrot.slane %v1010, %v1486
  %v1488 = vsel %vm1408, %v1487, %v1483
  %v1489 = vlaneseq
  %v1490 = vshrl.u32 %v1489, 7
  %v1491 = vsub.s32 %v1300, %v1490
  %v1492 = vrot.slane %v1013, %v1491
  %v1493 = vlaneseq
  %v1494 = vshrl.u32 %v1493, 7
  %v1495 = vsub.s32 %v1305, %v1494
  %v1496 = vrot.slane %v1016, %v1495
  %v1497 = vsel %vm1310, %v1496, %v1492
  %v1498 = vlaneseq
  %v1499 = vshrl.u32 %v1498, 7
  %v1500 = vsub.s32 %v1312, %v1499
  %v1501 = vrot.slane %v1019, %v1500
  %v1502 = vsel %vm1317, %v1501, %v1497
  %v1503 = vlaneseq
  %v1504 = vshrl.u32 %v1503, 7
  %v1505 = vsub.s32 %v1319, %v1504
  %v1506 = vrot.slane %v1022, %v1505
  %v1507 = vsel %vm1324, %v1506, %v1502
  %v1508 = vlaneseq
  %v1509 = vshrl.u32 %v1508, 7
  %v1510 = vsub.s32 %v1326, %v1509
  %v1511 = vrot.slane %v1025, %v1510
  %v1512 = vsel %vm1331, %v1511, %v1507
  %v1513 = vlaneseq
  %v1514 = vshrl.u32 %v1513, 7
  %v1515 = vsub.s32 %v1333, %v1514
  %v1516 = vrot.slane %v1028, %v1515
  %v1517 = vsel %vm1338, %v1516, %v1512
  %v1518 = vlaneseq
  %v1519 = vshrl.u32 %v1518, 7
  %v1520 = vsub.s32 %v1340, %v1519
  %v1521 = vrot.slane %v1031, %v1520
  %v1522 = vsel %vm1345, %v1521, %v1517
  %v1523 = vlaneseq
  %v1524 = vshrl.u32 %v1523, 7
  %v1525 = vsub.s32 %v1347, %v1524
  %v1526 = vrot.slane %v1034, %v1525
  %v1527 = vsel %vm1352, %v1526, %v1522
  %v1528 = vlaneseq
  %v1529 = vshrl.u32 %v1528, 7
  %v1530 = vsub.s32 %v1354, %v1529
  %v1531 = vrot.slane %v1037, %v1530
  %v1532 = vsel %vm1359, %v1531, %v1527
  %v1533 = vlaneseq
  %v1534 = vshrl.u32 %v1533, 7
  %v1535 = vsub.s32 %v1361, %v1534
  %v1536 = vrot.slane %v1040, %v1535
  %v1537 = vsel %vm1366, %v1536, %v1532
  %v1538 = vlaneseq
  %v1539 = vshrl.u32 %v1538, 7
  %v1540 = vsub.s32 %v1368, %v1539
  %v1541 = vrot.slane %v1043, %v1540
  %v1542 = vsel %vm1373, %v1541, %v1537
  %v1543 = vlaneseq
  %v1544 = vshrl.u32 %v1543, 7
  %v1545 = vsub.s32 %v1375, %v1544
  %v1546 = vrot.slane %v1046, %v1545
  %v1547 = vsel %vm1380, %v1546, %v1542
  %v1548 = vlaneseq
  %v1549 = vshrl.u32 %v1548, 7
  %v1550 = vsub.s32 %v1382, %v1549
  %v1551 = vrot.slane %v1049, %v1550
  %v1552 = vsel %vm1387, %v1551, %v1547
  %v1553 = vlaneseq
  %v1554 = vshrl.u32 %v1553, 7
  %v1555 = vsub.s32 %v1389, %v1554
  %v1556 = vrot.slane %v1052, %v1555
  %v1557 = vsel %vm1394, %v1556, %v1552
  %v1558 = vlaneseq
  %v1559 = vshrl.u32 %v1558, 7
  %v1560 = vsub.s32 %v1396, %v1559
  %v1561 = vrot.slane %v1055, %v1560
  %v1562 = vsel %vm1401, %v1561, %v1557
  %v1563 = vlaneseq
  %v1564 = vshrl.u32 %v1563, 7
  %v1565 = vsub.s32 %v1403, %v1564
  %v1566 = vrot.slane %v1058, %v1565
  %v1567 = vsel %vm1408, %v1566, %v1562
  %v1568 = vlaneseq
  %v1569 = vshrl.u32 %v1568, 7
  %v1570 = vsub.s32 %v1300, %v1569
  %v1571 = vrot.slane %v1061, %v1570
  %v1572 = vlaneseq
  %v1573 = vshrl.u32 %v1572, 7
  %v1574 = vsub.s32 %v1305, %v1573
  %v1575 = vrot.slane %v1064, %v1574
  %v1576 = vsel %vm1310, %v1575, %v1571
  %v1577 = vlaneseq
  %v1578 = vshrl.u32 %v1577, 7
  %v1579 = vsub.s32 %v1312, %v1578
  %v1580 = vrot.slane %v1067, %v1579
  %v1581 = vsel %vm1317, %v1580, %v1576
  %v1582 = vlaneseq
  %v1583 = vshrl.u32 %v1582, 7
  %v1584 = vsub.s32 %v1319, %v1583
  %v1585 = vrot.slane %v1070, %v1584
  %v1586 = vsel %vm1324, %v1585, %v1581
  %v1587 = vlaneseq
  %v1588 = vshrl.u32 %v1587, 7
  %v1589 = vsub.s32 %v1326, %v1588
  %v1590 = vrot.slane %v1073, %v1589
  %v1591 = vsel %vm1331, %v1590, %v1586
  %v1592 = vlaneseq
  %v1593 = vshrl.u32 %v1592, 7
  %v1594 = vsub.s32 %v1333, %v1593
  %v1595 = vrot.slane %v1076, %v1594
  %v1596 = vsel %vm1338, %v1595, %v1591
  %v1597 = vlaneseq
  %v1598 = vshrl.u32 %v1597, 7
  %v1599 = vsub.s32 %v1340, %v1598
  %v1600 = vrot.slane %v1079, %v1599
  %v1601 = vsel %vm1345, %v1600, %v1596
  %v1602 = vlaneseq
  %v1603 = vshrl.u32 %v1602, 7
  %v1604 = vsub.s32 %v1347, %v1603
  %v1605 = vrot.slane %v1082, %v1604
  %v1606 = vsel %vm1352, %v1605, %v1601
  %v1607 = vlaneseq
  %v1608 = vshrl.u32 %v1607, 7
  %v1609 = vsub.s32 %v1354, %v1608
  %v1610 = vrot.slane %v1085, %v1609
  %v1611 = vsel %vm1359, %v1610, %v1606
  %v1612 = vlaneseq
  %v1613 = vshrl.u32 %v1612, 7
  %v1614 = vsub.s32 %v1361, %v1613
  %v1615 = vrot.slane %v1088, %v1614
  %v1616 = vsel %vm1366, %v1615, %v1611
  %v1617 = vlaneseq
  %v1618 = vshrl.u32 %v1617, 7
  %v1619 = vsub.s32 %v1368, %v1618
  %v1620 = vrot.slane %v1091, %v1619
  %v1621 = vsel %vm1373, %v1620, %v1616
  %v1622 = vlaneseq
  %v1623 = vshrl.u32 %v1622, 7
  %v1624 = vsub.s32 %v1375, %v1623
  %v1625 = vrot.slane %v1094, %v1624
  %v1626 = vsel %vm1380, %v1625, %v1621
  %v1627 = vlaneseq
  %v1628 = vshrl.u32 %v1627, 7
  %v1629 = vsub.s32 %v1382, %v1628
  %v1630 = vrot.slane %v1097, %v1629
  %v1631 = vsel %vm1387, %v1630, %v1626
  %v1632 = vlaneseq
  %v1633 = vshrl.u32 %v1632, 7
  %v1634 = vsub.s32 %v1389, %v1633
  %v1635 = vrot.slane %v1100, %v1634
  %v1636 = vsel %vm1394, %v1635, %v1631
  %v1637 = vlaneseq
  %v1638 = vshrl.u32 %v1637, 7
  %v1639 = vsub.s32 %v1396, %v1638
  %v1640 = vrot.slane %v1103, %v1639
  %v1641 = vsel %vm1401, %v1640, %v1636
  %v1642 = vlaneseq
  %v1643 = vshrl.u32 %v1642, 7
  %v1644 = vsub.s32 %v1403, %v1643
  %v1645 = vrot.slane %v1106, %v1644
  %v1646 = vsel %vm1408, %v1645, %v1641
  %v1647 = vlaneseq
  %v1648 = vshrl.u32 %v1647, 7
  %v1649 = vsub.s32 %v1300, %v1648
  %v1650 = vrot.slane %v1109, %v1649
  %v1651 = vlaneseq
  %v1652 = vshrl.u32 %v1651, 7
  %v1653 = vsub.s32 %v1305, %v1652
  %v1654 = vrot.slane %v1112, %v1653
  %v1655 = vsel %vm1310, %v1654, %v1650
  %v1656 = vlaneseq
  %v1657 = vshrl.u32 %v1656, 7
  %v1658 = vsub.s32 %v1312, %v1657
  %v1659 = vrot.slane %v1115, %v1658
  %v1660 = vsel %vm1317, %v1659, %v1655
  %v1661 = vlaneseq
  %v1662 = vshrl.u32 %v1661, 7
  %v1663 = vsub.s32 %v1319, %v1662
  %v1664 = vrot.slane %v1118, %v1663
  %v1665 = vsel %vm1324, %v1664, %v1660
  %v1666 = vlaneseq
  %v1667 = vshrl.u32 %v1666, 7
  %v1668 = vsub.s32 %v1326, %v1667
  %v1669 = vrot.slane %v1121, %v1668
  %v1670 = vsel %vm1331, %v1669, %v1665
  %v1671 = vlaneseq
  %v1672 = vshrl.u32 %v1671, 7
  %v1673 = vsub.s32 %v1333, %v1672
  %v1674 = vrot.slane %v1124, %v1673
  %v1675 = vsel %vm1338, %v1674, %v1670
  %v1676 = vlaneseq
  %v1677 = vshrl.u32 %v1676, 7
  %v1678 = vsub.s32 %v1340, %v1677
  %v1679 = vrot.slane %v1127, %v1678
  %v1680 = vsel %vm1345, %v1679, %v1675
  %v1681 = vlaneseq
  %v1682 = vshrl.u32 %v1681, 7
  %v1683 = vsub.s32 %v1347, %v1682
  %v1684 = vrot.slane %v1130, %v1683
  %v1685 = vsel %vm1352, %v1684, %v1680
  %v1686 = vlaneseq
  %v1687 = vshrl.u32 %v1686, 7
  %v1688 = vsub.s32 %v1354, %v1687
  %v1689 = vrot.slane %v1133, %v1688
  %v1690 = vsel %vm1359, %v1689, %v1685
  %v1691 = vlaneseq
  %v1692 = vshrl.u32 %v1691, 7
  %v1693 = vsub.s32 %v1361, %v1692
  %v1694 = vrot.slane %v1136, %v1693
  %v1695 = vsel %vm1366, %v1694, %v1690
  %v1696 = vlaneseq
  %v1697 = vshrl.u32 %v1696, 7
  %v1698 = vsub.s32 %v1368, %v1697
  %v1699 = vrot.slane %v1139, %v1698
  %v1700 = vsel %vm1373, %v1699, %v1695
  %v1701 = vlaneseq
  %v1702 = vshrl.u32 %v1701, 7
  %v1703 = vsub.s32 %v1375, %v1702
  %v1704 = vrot.slane %v1142, %v1703
  %v1705 = vsel %vm1380, %v1704, %v1700
  %v1706 = vlaneseq
  %v1707 = vshrl.u32 %v1706, 7
  %v1708 = vsub.s32 %v1382, %v1707
  %v1709 = vrot.slane %v1145, %v1708
  %v1710 = vsel %vm1387, %v1709, %v1705
  %v1711 = vlaneseq
  %v1712 = vshrl.u32 %v1711, 7
  %v1713 = vsub.s32 %v1389, %v1712
  %v1714 = vrot.slane %v1148, %v1713
  %v1715 = vsel %vm1394, %v1714, %v1710
  %v1716 = vlaneseq
  %v1717 = vshrl.u32 %v1716, 7
  %v1718 = vsub.s32 %v1396, %v1717
  %v1719 = vrot.slane %v1151, %v1718
  %v1720 = vsel %vm1401, %v1719, %v1715
  %v1721 = vlaneseq
  %v1722 = vshrl.u32 %v1721, 7
  %v1723 = vsub.s32 %v1403, %v1722
  %v1724 = vrot.slane %v1154, %v1723
  %v1725 = vsel %vm1408, %v1724, %v1720
  %v1726 = vlaneseq
  %v1727 = vshrl.u32 %v1726, 7
  %v1728 = vsub.s32 %v1300, %v1727
  %v1729 = vrot.slane %v1157, %v1728
  %v1730 = vlaneseq
  %v1731 = vshrl.u32 %v1730, 7
  %v1732 = vsub.s32 %v1305, %v1731
  %v1733 = vrot.slane %v1160, %v1732
  %v1734 = vsel %vm1310, %v1733, %v1729
  %v1735 = vlaneseq
  %v1736 = vshrl.u32 %v1735, 7
  %v1737 = vsub.s32 %v1312, %v1736
  %v1738 = vrot.slane %v1163, %v1737
  %v1739 = vsel %vm1317, %v1738, %v1734
  %v1740 = vlaneseq
  %v1741 = vshrl.u32 %v1740, 7
  %v1742 = vsub.s32 %v1319, %v1741
  %v1743 = vrot.slane %v1166, %v1742
  %v1744 = vsel %vm1324, %v1743, %v1739
  %v1745 = vlaneseq
  %v1746 = vshrl.u32 %v1745, 7
  %v1747 = vsub.s32 %v1326, %v1746
  %v1748 = vrot.slane %v1169, %v1747
  %v1749 = vsel %vm1331, %v1748, %v1744
  %v1750 = vlaneseq
  %v1751 = vshrl.u32 %v1750, 7
  %v1752 = vsub.s32 %v1333, %v1751
  %v1753 = vrot.slane %v1172, %v1752
  %v1754 = vsel %vm1338, %v1753, %v1749
  %v1755 = vlaneseq
  %v1756 = vshrl.u32 %v1755, 7
  %v1757 = vsub.s32 %v1340, %v1756
  %v1758 = vrot.slane %v1175, %v1757
  %v1759 = vsel %vm1345, %v1758, %v1754
  %v1760 = vlaneseq
  %v1761 = vshrl.u32 %v1760, 7
  %v1762 = vsub.s32 %v1347, %v1761
  %v1763 = vrot.slane %v1178, %v1762
  %v1764 = vsel %vm1352, %v1763, %v1759
  %v1765 = vlaneseq
  %v1766 = vshrl.u32 %v1765, 7
  %v1767 = vsub.s32 %v1354, %v1766
  %v1768 = vrot.slane %v1181, %v1767
  %v1769 = vsel %vm1359, %v1768, %v1764
  %v1770 = vlaneseq
  %v1771 = vshrl.u32 %v1770, 7
  %v1772 = vsub.s32 %v1361, %v1771
  %v1773 = vrot.slane %v1184, %v1772
  %v1774 = vsel %vm1366, %v1773, %v1769
  %v1775 = vlaneseq
  %v1776 = vshrl.u32 %v1775, 7
  %v1777 = vsub.s32 %v1368, %v1776
  %v1778 = vrot.slane %v1187, %v1777
  %v1779 = vsel %vm1373, %v1778, %v1774
  %v1780 = vlaneseq
  %v1781 = vshrl.u32 %v1780, 7
  %v1782 = vsub.s32 %v1375, %v1781
  %v1783 = vrot.slane %v1190, %v1782
  %v1784 = vsel %vm1380, %v1783, %v1779
  %v1785 = vlaneseq
  %v1786 = vshrl.u32 %v1785, 7
  %v1787 = vsub.s32 %v1382, %v1786
  %v1788 = vrot.slane %v1193, %v1787
  %v1789 = vsel %vm1387, %v1788, %v1784
  %v1790 = vlaneseq
  %v1791 = vshrl.u32 %v1790, 7
  %v1792 = vsub.s32 %v1389, %v1791
  %v1793 = vrot.slane %v1196, %v1792
  %v1794 = vsel %vm1394, %v1793, %v1789
  %v1795 = vlaneseq
  %v1796 = vshrl.u32 %v1795, 7
  %v1797 = vsub.s32 %v1396, %v1796
  %v1798 = vrot.slane %v1199, %v1797
  %v1799 = vsel %vm1401, %v1798, %v1794
  %v1800 = vlaneseq
  %v1801 = vshrl.u32 %v1800, 7
  %v1802 = vsub.s32 %v1403, %v1801
  %v1803 = vrot.slane %v1202, %v1802
  %v1804 = vsel %vm1408, %v1803, %v1799
  %v1805 = vlaneseq
  %v1806 = vshrl.u32 %v1805, 7
  %v1807 = vsub.s32 %v1300, %v1806
  %v1808 = vrot.slane %v1205, %v1807
  %v1809 = vlaneseq
  %v1810 = vshrl.u32 %v1809, 7
  %v1811 = vsub.s32 %v1305, %v1810
  %v1812 = vrot.slane %v1208, %v1811
  %v1813 = vsel %vm1310, %v1812, %v1808
  %v1814 = vlaneseq
  %v1815 = vshrl.u32 %v1814, 7
  %v1816 = vsub.s32 %v1312, %v1815
  %v1817 = vrot.slane %v1211, %v1816
  %v1818 = vsel %vm1317, %v1817, %v1813
  %v1819 = vlaneseq
  %v1820 = vshrl.u32 %v1819, 7
  %v1821 = vsub.s32 %v1319, %v1820
  %v1822 = vrot.slane %v1214, %v1821
  %v1823 = vsel %vm1324, %v1822, %v1818
  %v1824 = vlaneseq
  %v1825 = vshrl.u32 %v1824, 7
  %v1826 = vsub.s32 %v1326, %v1825
  %v1827 = vrot.slane %v1217, %v1826
  %v1828 = vsel %vm1331, %v1827, %v1823
  %v1829 = vlaneseq
  %v1830 = vshrl.u32 %v1829, 7
  %v1831 = vsub.s32 %v1333, %v1830
  %v1832 = vrot.slane %v1220, %v1831
  %v1833 = vsel %vm1338, %v1832, %v1828
  %v1834 = vlaneseq
  %v1835 = vshrl.u32 %v1834, 7
  %v1836 = vsub.s32 %v1340, %v1835
  %v1837 = vrot.slane %v1223, %v1836
  %v1838 = vsel %vm1345, %v1837, %v1833
  %v1839 = vlaneseq
  %v1840 = vshrl.u32 %v1839, 7
  %v1841 = vsub.s32 %v1347, %v1840
  %v1842 = vrot.slane %v1226, %v1841
  %v1843 = vsel %vm1352, %v1842, %v1838
  %v1844 = vlaneseq
  %v1845 = vshrl.u32 %v1844, 7
  %v1846 = vsub.s32 %v1354, %v1845
  %v1847 = vrot.slane %v1229, %v1846
  %v1848 = vsel %vm1359, %v1847, %v1843
  %v1849 = vlaneseq
  %v1850 = vshrl.u32 %v1849, 7
  %v1851 = vsub.s32 %v1361, %v1850
  %v1852 = vrot.slane %v1232, %v1851
  %v1853 = vsel %vm1366, %v1852, %v1848
  %v1854 = vlaneseq
  %v1855 = vshrl.u32 %v1854, 7
  %v1856 = vsub.s32 %v1368, %v1855
  %v1857 = vrot.slane %v1235, %v1856
  %v1858 = vsel %vm1373, %v1857, %v1853
  %v1859 = vlaneseq
  %v1860 = vshrl.u32 %v1859, 7
  %v1861 = vsub.s32 %v1375, %v1860
  %v1862 = vrot.slane %v1238, %v1861
  %v1863 = vsel %vm1380, %v1862, %v1858
  %v1864 = vlaneseq
  %v1865 = vshrl.u32 %v1864, 7
  %v1866 = vsub.s32 %v1382, %v1865
  %v1867 = vrot.slane %v1241, %v1866
  %v1868 = vsel %vm1387, %v1867, %v1863
  %v1869 = vlaneseq
  %v1870 = vshrl.u32 %v1869, 7
  %v1871 = vsub.s32 %v1389, %v1870
  %v1872 = vrot.slane %v1244, %v1871
  %v1873 = vsel %vm1394, %v1872, %v1868
  %v1874 = vlaneseq
  %v1875 = vshrl.u32 %v1874, 7
  %v1876 = vsub.s32 %v1396, %v1875
  %v1877 = vrot.slane %v1247, %v1876
  %v1878 = vsel %vm1401, %v1877, %v1873
  %v1879 = vlaneseq
  %v1880 = vshrl.u32 %v1879, 7
  %v1881 = vsub.s32 %v1403, %v1880
  %v1882 = vrot.slane %v1250, %v1881
  %v1883 = vsel %vm1408, %v1882, %v1878
  %v1884 = vlaneseq
  %v1885 = vshrl.u32 %v1884, 7
  %v1886 = vsub.s32 %v1300, %v1885
  %v1887 = vrot.slane %v1253, %v1886
  %v1888 = vlaneseq
  %v1889 = vshrl.u32 %v1888, 7
  %v1890 = vsub.s32 %v1305, %v1889
  %v1891 = vrot.slane %v1256, %v1890
  %v1892 = vsel %vm1310, %v1891, %v1887
  %v1893 = vlaneseq
  %v1894 = vshrl.u32 %v1893, 7
  %v1895 = vsub.s32 %v1312, %v1894
  %v1896 = vrot.slane %v1259, %v1895
  %v1897 = vsel %vm1317, %v1896, %v1892
  %v1898 = vlaneseq
  %v1899 = vshrl.u32 %v1898, 7
  %v1900 = vsub.s32 %v1319, %v1899
  %v1901 = vrot.slane %v1262, %v1900
  %v1902 = vsel %vm1324, %v1901, %v1897
  %v1903 = vlaneseq
  %v1904 = vshrl.u32 %v1903, 7
  %v1905 = vsub.s32 %v1326, %v1904
  %v1906 = vrot.slane %v1265, %v1905
  %v1907 = vsel %vm1331, %v1906, %v1902
  %v1908 = vlaneseq
  %v1909 = vshrl.u32 %v1908, 7
  %v1910 = vsub.s32 %v1333, %v1909
  %v1911 = vrot.slane %v1268, %v1910
  %v1912 = vsel %vm1338, %v1911, %v1907
  %v1913 = vlaneseq
  %v1914 = vshrl.u32 %v1913, 7
  %v1915 = vsub.s32 %v1340, %v1914
  %v1916 = vrot.slane %v1271, %v1915
  %v1917 = vsel %vm1345, %v1916, %v1912
  %v1918 = vlaneseq
  %v1919 = vshrl.u32 %v1918, 7
  %v1920 = vsub.s32 %v1347, %v1919
  %v1921 = vrot.slane %v1274, %v1920
  %v1922 = vsel %vm1352, %v1921, %v1917
  %v1923 = vlaneseq
  %v1924 = vshrl.u32 %v1923, 7
  %v1925 = vsub.s32 %v1354, %v1924
  %v1926 = vrot.slane %v1277, %v1925
  %v1927 = vsel %vm1359, %v1926, %v1922
  %v1928 = vlaneseq
  %v1929 = vshrl.u32 %v1928, 7
  %v1930 = vsub.s32 %v1361, %v1929
  %v1931 = vrot.slane %v1280, %v1930
  %v1932 = vsel %vm1366, %v1931, %v1927
  %v1933 = vlaneseq
  %v1934 = vshrl.u32 %v1933, 7
  %v1935 = vsub.s32 %v1368, %v1934
  %v1936 = vrot.slane %v1283, %v1935
  %v1937 = vsel %vm1373, %v1936, %v1932
  %v1938 = vlaneseq
  %v1939 = vshrl.u32 %v1938, 7
  %v1940 = vsub.s32 %v1375, %v1939
  %v1941 = vrot.slane %v1286, %v1940
  %v1942 = vsel %vm1380, %v1941, %v1937
  %v1943 = vlaneseq
  %v1944 = vshrl.u32 %v1943, 7
  %v1945 = vsub.s32 %v1382, %v1944
  %v1946 = vrot.slane %v1289, %v1945
  %v1947 = vsel %vm1387, %v1946, %v1942
  %v1948 = vlaneseq
  %v1949 = vshrl.u32 %v1948, 7
  %v1950 = vsub.s32 %v1389, %v1949
  %v1951 = vrot.slane %v1292, %v1950
  %v1952 = vsel %vm1394, %v1951, %v1947
  %v1953 = vlaneseq
  %v1954 = vshrl.u32 %v1953, 7
  %v1955 = vsub.s32 %v1396, %v1954
  %v1956 = vrot.slane %v1295, %v1955
  %v1957 = vsel %vm1401, %v1956, %v1952
  %v1958 = vlaneseq
  %v1959 = vshrl.u32 %v1958, 7
  %v1960 = vsub.s32 %v1403, %v1959
  %v1961 = vrot.slane %v1298, %v1960
  %v1962 = vsel %vm1408, %v1961, %v1957
  %vm1963 = vcmask 1041409
  %v1964 = vsel %vm1963, %v1488, %v1409
  %vm1965 = vcmask 1042434
  %v1966 = vsel %vm1965, %v1567, %v1964
  %vm1967 = vcmask 1043459
  %v1968 = vsel %vm1967, %v1646, %v1966
  %vm1969 = vcmask 1044484
  %v1970 = vsel %vm1969, %v1725, %v1968
  %vm1971 = vcmask 1045509
  %v1972 = vsel %vm1971, %v1804, %v1970
  %vm1973 = vcmask 1046534
  %v1974 = vsel %vm1973, %v1883, %v1972
  %vm1975 = vcmask 1047559
  %v1976 = vsel %vm1975, %v1962, %v1974
  %1978 = vst [vmem:[%s2] sm:$0xff] %v1976
  // Predicated region
  $region10: #{dummy_model_forward_packed.1} parent=0 // pred_check
    _
  $region11: #{dummy_model_forward_packed.1} parent=0 // pred_check_branch
    %1980 = sbr.rel (0) target = $region13
  $region12: #{dummy_model_forward_packed.1} parent=0 // pred_region
    _
  $region13: #{dummy_model_forward_packed.1} parent=0 // pred_fallthru
    _
  // Predicated region
  $region14: #{dummy_model_forward_packed.1} parent=0 // pred_check
    _
  $region15: #{dummy_model_forward_packed.1} parent=0 // pred_check_branch
    %1982 = sbr.rel (0) target = $region17
  $region16: #{dummy_model_forward_packed.1} parent=0 // pred_region
    _
  $region17: #{dummy_model_forward_packed.1} parent=0 // pred_fallthru
    _

</llo_original>
